<compile_context>
chip_gen: v5e
topology: v5e:2x2
jax: 0.10.0
libtpu: 0.0.40
codegen_flags: <defaults>
</compile_context>

<pallas_src>
import functools
import math

import jax
import jax.numpy as jnp
import numpy as np
from jax.experimental import pallas as pl
from jax.experimental.pallas import tpu as pltpu

_HID = 512            # hidden width of every Linear layer
_LANE = 128           # TPU lane width
_TILE_MAX = 512       # max batch rows per grid step
_VMEM_CAP = 48 << 20  # conservative scoped-VMEM cap (v7x has 64 MiB / TC)


def _round_up(x, m):
    return (x + m - 1) // m * m


def _leaky_relu(x, slope=0.2):
    return jnp.where(x > 0, x, slope * x)


# ---------------------------------------------------------------------------
# Pallas kernel: one batch tile of the full discriminator MLP.
#   layer1: [img | emb] @ w1 + b1, LeakyReLU(0.2)
#   layer2: Linear(512,512) + Dropout(0.4)[eval -> identity] + LeakyReLU(0.2)
#   layer3: Linear(512,512) + Dropout(0.4)[eval -> identity] + LeakyReLU(0.2)
#   layer4: Linear(512,1)   + Sigmoid   (VPU multiply + XLU lane reduction)
# ---------------------------------------------------------------------------
def _mlp_kernel(x_img_ref, x_emb_ref, w1i_ref, w1e_ref, w2_ref, w3_ref,
                pk_ref, o_ref):
    # Packed epilogue params (resident, f32): rows 0..2 = b1,b2,b3; row 3 = w4
    # laid out as a row; element [4, 0] = b4.  Static slices -> zero-cost views.
    b1 = pk_ref[0:1, :]
    b2 = pk_ref[1:2, :]
    b3 = pk_ref[2:3, :]
    w4 = pk_ref[3:4, :]
    b4 = pk_ref[4:5, 0:1]

    # Layer 1: split matmul over the [img | emb] halves (no concat in HBM).
    # The f32 -> bf16 cast of the activations is fused here (not in the wrapper).
    x_img = x_img_ref[...].astype(jnp.bfloat16)
    x_emb = x_emb_ref[...].astype(jnp.bfloat16)
    h = jnp.dot(x_img, w1i_ref[...], preferred_element_type=jnp.float32)
    h = h + jnp.dot(x_emb, w1e_ref[...], preferred_element_type=jnp.float32)
    h = _leaky_relu(h + b1)

    # TODO(synk): nn.Dropout(0.4) is modeled in eval mode (identity); training-mode
    # stochastic masking would use pltpu.prng_seed / pltpu.prng_random_bits.
    # Layer 2.
    h = jnp.dot(h.astype(jnp.bfloat16), w2_ref[...],
                preferred_element_type=jnp.float32)
    h = _leaky_relu(h + b2)

    # Layer 3.
    h = jnp.dot(h.astype(jnp.bfloat16), w3_ref[...],
                preferred_element_type=jnp.float32)
    h = _leaky_relu(h + b3)

    # Layer 4: 512 -> 1 as f32 VPU multiply + XLU lane reduction (no N=1 MXU
    # matmul).  Store as a narrow (tile_b, 1) column: ~128x less HBM writeback
    # than broadcasting across 128 lanes, with no in-kernel layout change.
    logit = jnp.sum(h * w4, axis=-1, keepdims=True) + b4
    o_ref[...] = jax.nn.sigmoid(logit)


# ---------------------------------------------------------------------------
# Tile-size / VMEM-budget policy (generation-aware).
# ---------------------------------------------------------------------------
def _pick_tile_b(batch, d_img, n_cls_pad):
    # At least 2 grid steps when the batch allows (v7x dual-TensorCore sharding),
    # multiple of 16 (bf16 sublane packing), capped at _TILE_MAX, minimal padded
    # batch waste.
    n_split = max(2, pl.cdiv(batch, _TILE_MAX))
    tile_b = min(_TILE_MAX, max(16, _round_up(pl.cdiv(batch, n_split), 16)))

    def vmem_need(tb):
        w = (d_img + n_cls_pad + 2 * _HID) * _HID * 2 + 8 * _HID * 4  # single-buffered
        x = 2 * tb * (d_img + n_cls_pad) * 4                          # double-buffered inputs
        o = 2 * tb * _LANE * 4                                        # output (lane-padded)
        act = 6 * tb * _HID * 4                                       # f32 intermediates
        return w + x + o + act + (4 << 20)                            # headroom

    # If the working set would exceed the cap, shrink tile_b (never raise the cap
    # past what v7x's 64 MiB/TC can honor).
    while vmem_need(tile_b) > _VMEM_CAP and tile_b > 16:
        tile_b = max(16, _round_up(tile_b // 2, 16))
    return tile_b, vmem_need(tile_b)


# ---------------------------------------------------------------------------
# Wrapper: prep weights, build batch-tiled grid, call the kernel.
# ---------------------------------------------------------------------------
@jax.jit
def discriminator_cgan_forward(img, labels, params):
    """Matches DiscriminatorCGAN.forward(img, labels) semantics (eval mode)."""
    B = img.shape[0]
    img_flat = img.reshape(B, -1).astype(jnp.float32)
    # Embedding gather stays in the wrapper: it only touches (B, n_classes) floats,
    # negligible next to the image tensor streamed by the kernel.
    emb = jnp.take(params["embedding"], labels, axis=0).astype(jnp.float32)

    d_img = img_flat.shape[1]
    n_classes = params["embedding"].shape[1]
    n_cls_pad = _round_up(n_classes, _LANE)

    tile_b, vmem_need = _pick_tile_b(B, d_img, n_cls_pad)
    num_tiles = pl.cdiv(B, tile_b)
    b_pad = num_tiles * tile_b

    # Only the tiny embedding part gets lane padding; the image stays unpadded f32
    # (its block uses the full feature extent, so no extra HBM pass over it).
    if b_pad != B or n_cls_pad != n_classes:
        emb = jnp.pad(emb, ((0, b_pad - B), (0, n_cls_pad - n_classes)))
    if b_pad != B:
        img_flat = jnp.pad(img_flat, ((0, b_pad - B), (0, 0)))

    # Weights: bf16 for the MXU path; epilogue params packed into one (8,512) f32 block.
    w1 = params["w1"]                                              # (d_img + n_classes, 512)
    w1i = w1[:d_img].astype(jnp.bfloat16)
    w1e = jnp.pad(w1[d_img:], ((0, n_cls_pad - n_classes), (0, 0))).astype(jnp.bfloat16)
    w2 = params["w2"].astype(jnp.bfloat16)
    w3 = params["w3"].astype(jnp.bfloat16)
    packed = jnp.zeros((8, _HID), jnp.float32)
    packed = packed.at[0].set(params["b1"].reshape(_HID))
    packed = packed.at[1].set(params["b2"].reshape(_HID))
    packed = packed.at[2].set(params["b3"].reshape(_HID))
    packed = packed.at[3].set(params["w4"].reshape(_HID))          # (512,1) -> row
    packed = packed.at[4, 0].set(params["b4"].reshape(()))

    def _resident(shape):
        # Constant index_map across the grid -> single-buffer to save VMEM.
        return pl.BlockSpec(shape, lambda i: (0, 0), pipeline_mode=pl.Buffered(1))

    in_specs = [
        pl.BlockSpec((tile_b, d_img), lambda i: (i, 0)),      # x_img (per-tile, f32)
        pl.BlockSpec((tile_b, n_cls_pad), lambda i: (i, 0)),  # x_emb (per-tile, f32)
        _resident((d_img, _HID)),                             # w1_img (resident)
        _resident((n_cls_pad, _HID)),                         # w1_emb
        _resident((_HID, _HID)),                              # w2
        _resident((_HID, _HID)),                              # w3
        _resident((8, _HID)),                                 # packed b1/b2/b3/w4/b4
    ]
    out_spec = pl.BlockSpec((tile_b, 1), lambda i: (i, 0))

    flops = 2 * b_pad * ((d_img + n_cls_pad) * _HID + 2 * _HID * _HID + _HID)
    bytes_accessed = (b_pad * (d_img + n_cls_pad) * 4 + b_pad * 4
                      + (d_img + n_cls_pad + 2 * _HID) * _HID * 2 + 8 * _HID * 4)

    out = pl.pallas_call(
        _mlp_kernel,
        out_shape=jax.ShapeDtypeStruct((b_pad, 1), jnp.float32),
        grid=(num_tiles,),
        in_specs=in_specs,
        out_specs=out_spec,
        compiler_params=pltpu.CompilerParams(
            dimension_semantics=("parallel",),
            vmem_limit_bytes=int(min(_VMEM_CAP, max(32 << 20, vmem_need)))),
        cost_estimate=pl.CostEstimate(flops=flops, transcendentals=b_pad,
                                      bytes_accessed=bytes_accessed),
    )(img_flat, emb, w1i, w1e, w2, w3, packed)

    return out[:B]


# ---------------------------------------------------------------------------
# Deterministic parameter construction (mimics PyTorch default inits).
# ---------------------------------------------------------------------------
def init_params(key, n_classes, img_shape):
    d_img = math.prod(img_shape)
    d_in = n_classes + d_img

    def linear_init(k, fan_in, fan_out):
        kw, kb = jax.random.split(k)
        bound = 1.0 / jnp.sqrt(float(fan_in))
        w = jax.random.uniform(kw, (fan_in, fan_out), jnp.float32, -bound, bound)
        b = jax.random.uniform(kb, (1, fan_out), jnp.float32, -bound, bound)
        return w, b

    k_emb, k1, k2, k3, k4 = jax.random.split(key, 5)
    embedding = jax.random.normal(k_emb, (n_classes, n_classes), jnp.float32)
    w1, b1 = linear_init(k1, d_in, _HID)
    w2, b2 = linear_init(k2, _HID, _HID)
    w3, b3 = linear_init(k3, _HID, _HID)
    w4, b4 = linear_init(k4, _HID, 1)
    return dict(embedding=embedding,
                w1=w1, b1=b1, w2=w2, b2=b2, w3=w3, b3=b3, w4=w4, b4=b4)


def _reference(img, labels, params):
    """Pure-JAX f32 reference (eval mode), mirrors the PyTorch module."""
    B = img.shape[0]
    x = jnp.concatenate(
        [img.reshape(B, -1), jnp.take(params["embedding"], labels, axis=0)], axis=-1)
    h = _leaky_relu(x @ params["w1"] + params["b1"])
    h = _leaky_relu(h @ params["w2"] + params["b2"])
    h = _leaky_relu(h @ params["w3"] + params["b3"])
    return jax.nn.sigmoid(h @ params["w4"] + params["b4"])


if __name__ == "__main__":
    key = jax.random.PRNGKey(0)
    n_classes = 10
    img_shape = (1, 8, 8)           # (channels, H, W)
    B = 4

    k_params, k_img, k_lab = jax.random.split(key, 3)
    params = init_params(k_params, n_classes, img_shape)

    img = jax.random.normal(k_img, (B,) + img_shape, jnp.float32)   # NCHW
    labels = jax.random.randint(k_lab, (B,), 0, n_classes, jnp.int32)

    validity = discriminator_cgan_forward(img, labels, params)
    jax.block_until_ready(validity)

    ref = _reference(img, labels, params)
    assert validity.shape == (B, 1)
    # bf16 matmul operands (f32 accumulation) -> tolerance-based parity check.
    err = np.max(np.abs(np.asarray(validity) - np.asarray(ref)))
    assert np.allclose(np.asarray(validity), np.asarray(ref), atol=3e-2), err
    print("KERNEL_OK")
</pallas_src>

<mosaic_0001>
module attributes {stable_mosaic.version = 11 : i64} {
  func.func @_mlp_kernel(%arg0: i32, %arg1: memref<16x64xf32, #tpu.memory_space<vmem>>, %arg2: memref<16x128xf32, #tpu.memory_space<vmem>>, %arg3: memref<64x512xbf16, #tpu.memory_space<vmem>>, %arg4: memref<128x512xbf16, #tpu.memory_space<vmem>>, %arg5: memref<512x512xbf16, #tpu.memory_space<vmem>>, %arg6: memref<512x512xbf16, #tpu.memory_space<vmem>>, %arg7: memref<8x512xf32, #tpu.memory_space<vmem>>, %arg8: memref<16x1xf32, #tpu.memory_space<vmem>>) attributes {dimension_semantics = [#tpu.dimension_semantics<parallel>], iteration_bounds = array<i64: 1>, scalar_prefetch = 0 : i64, scratch_operands = 0 : i64, tpu.core_type = #tpu.core_type<tc>, window_params = [{transform_indices = @transform_0, window_bounds = array<i64: 16, 64>}, {transform_indices = @transform_1, window_bounds = array<i64: 16, 128>}, {pipeline_mode = #tpu.pipeline_mode<synchronous>, transform_indices = @transform_2, window_bounds = array<i64: 64, 512>}, {pipeline_mode = #tpu.pipeline_mode<synchronous>, transform_indices = @transform_3, window_bounds = array<i64: 128, 512>}, {pipeline_mode = #tpu.pipeline_mode<synchronous>, transform_indices = @transform_4, window_bounds = array<i64: 512, 512>}, {pipeline_mode = #tpu.pipeline_mode<synchronous>, transform_indices = @transform_5, window_bounds = array<i64: 512, 512>}, {pipeline_mode = #tpu.pipeline_mode<synchronous>, transform_indices = @transform_6, window_bounds = array<i64: 8, 512>}, {transform_indices = @transform_7, window_bounds = array<i64: 16, 1>}]} {
    %c0 = arith.constant 0 : index
    %c0_0 = arith.constant 0 : index
    %0 = vector.load %arg7[%c0, %c0_0] : memref<8x512xf32, #tpu.memory_space<vmem>>, vector<1x512xf32>
    %c1 = arith.constant 1 : index
    %c0_1 = arith.constant 0 : index
    %1 = vector.load %arg7[%c1, %c0_1] : memref<8x512xf32, #tpu.memory_space<vmem>>, vector<1x512xf32>
    %c2 = arith.constant 2 : index
    %c0_2 = arith.constant 0 : index
    %2 = vector.load %arg7[%c2, %c0_2] : memref<8x512xf32, #tpu.memory_space<vmem>>, vector<1x512xf32>
    %c3 = arith.constant 3 : index
    %c0_3 = arith.constant 0 : index
    %3 = vector.load %arg7[%c3, %c0_3] : memref<8x512xf32, #tpu.memory_space<vmem>>, vector<1x512xf32>
    %c4 = arith.constant 4 : index
    %c0_4 = arith.constant 0 : index
    %4 = vector.load %arg7[%c4, %c0_4] : memref<8x512xf32, #tpu.memory_space<vmem>>, vector<1x1xf32>
    %c0_5 = arith.constant 0 : index
    %c0_6 = arith.constant 0 : index
    %5 = vector.load %arg1[%c0_5, %c0_6] : memref<16x64xf32, #tpu.memory_space<vmem>>, vector<16x64xf32>
    %6 = arith.truncf %5 : vector<16x64xf32> to vector<16x64xbf16>
    %c0_7 = arith.constant 0 : index
    %c0_8 = arith.constant 0 : index
    %7 = vector.load %arg2[%c0_7, %c0_8] : memref<16x128xf32, #tpu.memory_space<vmem>>, vector<16x128xf32>
    %8 = arith.truncf %7 : vector<16x128xf32> to vector<16x128xbf16>
    %c0_9 = arith.constant 0 : index
    %c0_10 = arith.constant 0 : index
    %9 = vector.load %arg3[%c0_9, %c0_10] : memref<64x512xbf16, #tpu.memory_space<vmem>>, vector<64x512xbf16>
    %cst = arith.constant dense<0.000000e+00> : vector<16x512xf32>
    %10 = tpu.matmul %6, %9, %cst {dimension_numbers = #tpu.dot_dimension_numbers<[1], [0], [0], [1], [0, 0, 1, 1], [], []>} : vector<16x64xbf16>, vector<64x512xbf16>, vector<16x512xf32> -> vector<16x512xf32>
    %c0_11 = arith.constant 0 : index
    %c0_12 = arith.constant 0 : index
    %11 = vector.load %arg4[%c0_11, %c0_12] : memref<128x512xbf16, #tpu.memory_space<vmem>>, vector<128x512xbf16>
    %cst_13 = arith.constant dense<0.000000e+00> : vector<16x512xf32>
    %12 = tpu.matmul %8, %11, %cst_13 {dimension_numbers = #tpu.dot_dimension_numbers<[1], [0], [0], [1], [0, 0, 1, 1], [], []>} : vector<16x128xbf16>, vector<128x512xbf16>, vector<16x512xf32> -> vector<16x512xf32>
    %13 = arith.addf %10, %12 : vector<16x512xf32>
    %14 = vector.broadcast %0 : vector<1x512xf32> to vector<16x512xf32>
    %15 = arith.addf %13, %14 : vector<16x512xf32>
    %cst_14 = arith.constant 0.000000e+00 : f32
    %16 = vector.broadcast %cst_14 : f32 to vector<16x512xf32>
    %17 = arith.cmpf ogt, %15, %16 : vector<16x512xf32>
    %cst_15 = arith.constant 2.000000e-01 : f32
    %18 = vector.broadcast %cst_15 : f32 to vector<16x512xf32>
    %19 = arith.mulf %18, %15 : vector<16x512xf32>
    %20 = arith.select %17, %15, %19 : vector<16x512xi1>, vector<16x512xf32>
    %21 = arith.truncf %20 : vector<16x512xf32> to vector<16x512xbf16>
    %c0_16 = arith.constant 0 : index
    %c0_17 = arith.constant 0 : index
    %22 = vector.load %arg5[%c0_16, %c0_17] : memref<512x512xbf16, #tpu.memory_space<vmem>>, vector<512x512xbf16>
    %cst_18 = arith.constant dense<0.000000e+00> : vector<16x512xf32>
    %23 = tpu.matmul %21, %22, %cst_18 {dimension_numbers = #tpu.dot_dimension_numbers<[1], [0], [0], [1], [0, 0, 1, 1], [], []>} : vector<16x512xbf16>, vector<512x512xbf16>, vector<16x512xf32> -> vector<16x512xf32>
    %24 = vector.broadcast %1 : vector<1x512xf32> to vector<16x512xf32>
    %25 = arith.addf %23, %24 : vector<16x512xf32>
    %cst_19 = arith.constant 0.000000e+00 : f32
    %26 = vector.broadcast %cst_19 : f32 to vector<16x512xf32>
    %27 = arith.cmpf ogt, %25, %26 : vector<16x512xf32>
    %cst_20 = arith.constant 2.000000e-01 : f32
    %28 = vector.broadcast %cst_20 : f32 to vector<16x512xf32>
    %29 = arith.mulf %28, %25 : vector<16x512xf32>
    %30 = arith.select %27, %25, %29 : vector<16x512xi1>, vector<16x512xf32>
    %31 = arith.truncf %30 : vector<16x512xf32> to vector<16x512xbf16>
    %c0_21 = arith.constant 0 : index
    %c0_22 = arith.constant 0 : index
    %32 = vector.load %arg6[%c0_21, %c0_22] : memref<512x512xbf16, #tpu.memory_space<vmem>>, vector<512x512xbf16>
    %cst_23 = arith.constant dense<0.000000e+00> : vector<16x512xf32>
    %33 = tpu.matmul %31, %32, %cst_23 {dimension_numbers = #tpu.dot_dimension_numbers<[1], [0], [0], [1], [0, 0, 1, 1], [], []>} : vector<16x512xbf16>, vector<512x512xbf16>, vector<16x512xf32> -> vector<16x512xf32>
    %34 = vector.broadcast %2 : vector<1x512xf32> to vector<16x512xf32>
    %35 = arith.addf %33, %34 : vector<16x512xf32>
    %cst_24 = arith.constant 0.000000e+00 : f32
    %36 = vector.broadcast %cst_24 : f32 to vector<16x512xf32>
    %37 = arith.cmpf ogt, %35, %36 : vector<16x512xf32>
    %cst_25 = arith.constant 2.000000e-01 : f32
    %38 = vector.broadcast %cst_25 : f32 to vector<16x512xf32>
    %39 = arith.mulf %38, %35 : vector<16x512xf32>
    %40 = arith.select %37, %35, %39 : vector<16x512xi1>, vector<16x512xf32>
    %41 = vector.broadcast %3 : vector<1x512xf32> to vector<16x512xf32>
    %42 = arith.mulf %40, %41 : vector<16x512xf32>
    %cst_26 = arith.constant dense<0.000000e+00> : vector<16xf32>
    %43 = vector.multi_reduction <add>, %42, %cst_26 [1] : vector<16x512xf32> to vector<16xf32>
    %44 = vector.shape_cast %43 : vector<16xf32> to vector<16x1xf32>
    %45 = vector.broadcast %4 : vector<1x1xf32> to vector<16x1xf32>
    %46 = arith.addf %44, %45 : vector<16x1xf32>
    %47 = arith.negf %46 : vector<16x1xf32>
    %48 = math.exp %47 : vector<16x1xf32>
    %cst_27 = arith.constant 1.000000e+00 : f32
    %49 = vector.broadcast %cst_27 : f32 to vector<16x1xf32>
    %50 = arith.addf %49, %48 : vector<16x1xf32>
    %51 = arith.divf %49, %50 : vector<16x1xf32>
    %c0_28 = arith.constant 0 : index
    %c0_29 = arith.constant 0 : index
    %52 = vector.load %arg8[%c0_28, %c0_29] : memref<16x1xf32, #tpu.memory_space<vmem>>, vector<16x1xf32>
    tpu.vector_store %arg8[%c0_28, %c0_29], %51 {strides = array<i32>} : memref<16x1xf32, #tpu.memory_space<vmem>>, vector<16x1xf32>,
    return
  }
  func.func @transform_0(%arg0: i32) -> (i32, i32) {
    %c0_i32 = arith.constant 0 : i32
    %c0_i32_0 = arith.constant 0 : i32
    return %arg0, %c0_i32 : i32, i32
  }
  func.func @transform_1(%arg0: i32) -> (i32, i32) {
    %c0_i32 = arith.constant 0 : i32
    %c0_i32_0 = arith.constant 0 : i32
    return %arg0, %c0_i32 : i32, i32
  }
  func.func @transform_2(%arg0: i32) -> (i32, i32) {
    %c0_i32 = arith.constant 0 : i32
    %c0_i32_0 = arith.constant 0 : i32
    %c0_i32_1 = arith.constant 0 : i32
    return %c0_i32, %c0_i32_0 : i32, i32
  }
  func.func @transform_3(%arg0: i32) -> (i32, i32) {
    %c0_i32 = arith.constant 0 : i32
    %c0_i32_0 = arith.constant 0 : i32
    %c0_i32_1 = arith.constant 0 : i32
    return %c0_i32, %c0_i32_0 : i32, i32
  }
  func.func @transform_4(%arg0: i32) -> (i32, i32) {
    %c0_i32 = arith.constant 0 : i32
    %c0_i32_0 = arith.constant 0 : i32
    %c0_i32_1 = arith.constant 0 : i32
    return %c0_i32, %c0_i32_0 : i32, i32
  }
  func.func @transform_5(%arg0: i32) -> (i32, i32) {
    %c0_i32 = arith.constant 0 : i32
    %c0_i32_0 = arith.constant 0 : i32
    %c0_i32_1 = arith.constant 0 : i32
    return %c0_i32, %c0_i32_0 : i32, i32
  }
  func.func @transform_6(%arg0: i32) -> (i32, i32) {
    %c0_i32 = arith.constant 0 : i32
    %c0_i32_0 = arith.constant 0 : i32
    %c0_i32_1 = arith.constant 0 : i32
    return %c0_i32, %c0_i32_0 : i32, i32
  }
  func.func @transform_7(%arg0: i32) -> (i32, i32) {
    %c0_i32 = arith.constant 0 : i32
    %c0_i32_0 = arith.constant 0 : i32
    return %arg0, %c0_i32 : i32, i32
  }
}

</mosaic_0001>

<llo_original>
// kernel: discriminator_cgan_forward.1
$region0: #{discriminator_cgan_forward.1}
  #allocation0 [shape = 'u32[]', space=smem, size = 0x4, offset = 0x4, fixed_abs, tag = 'smem constant byte address 0x4 - core index']
  #allocation1 [shape = 'u32[72,128]{1,0:T(1,128)}', space=vmem, size = 0x9000, scoped, tag = 'internal scratch']
  %s0 = inlined_call_operand.vmem [shape: f32[16,64], index: 0, kind: input, shape index: {}]
  %s1 = inlined_call_operand.vmem [shape: f32[16,128], index: 1, kind: input, shape index: {}]
  %s2 = inlined_call_operand.vmem [shape: bf16[64,512], index: 2, kind: input, shape index: {}]
  %s3 = inlined_call_operand.vmem [shape: bf16[128,512], index: 3, kind: input, shape index: {}]
  %s4 = inlined_call_operand.vmem [shape: bf16[512,512], index: 4, kind: input, shape index: {}]
  %s5 = inlined_call_operand.vmem [shape: bf16[512,512], index: 5, kind: input, shape index: {}]
  %s6 = inlined_call_operand.vmem [shape: f32[8,512], index: 6, kind: input, shape index: {}]
  %s7 = inlined_call_operand.vmem [shape: f32[16,1], index: 7, kind: output, shape index: {}]
  %s8 = sld [smem:[#allocation0]]
  $region38: #{discriminator_cgan_forward.1} parent=0
    _
  %s10 = ssub.s32 1, %s8
  %s11 = scalar_select 0, %s10, %s8
  // Predicated region
  $region2: #{discriminator_cgan_forward.1} parent=0 // pred_check
    _
  $region3: #{discriminator_cgan_forward.1} parent=0 // pred_check_branch
    %13 = sbr.rel (0) target = $region5
  $region4: #{discriminator_cgan_forward.1} parent=0 // pred_region
    _
  $region5: #{discriminator_cgan_forward.1} parent=0 // pred_fallthru
    _
  // Predicated region
  $region6: #{discriminator_cgan_forward.1} parent=0 // pred_check
    _
  $region7: #{discriminator_cgan_forward.1} parent=0 // pred_check_branch
    %15 = sbr.rel (0) target = $region9
  $region8: #{discriminator_cgan_forward.1} parent=0 // pred_region
    _
  $region9: #{discriminator_cgan_forward.1} parent=0 // pred_fallthru
    _
  // Predicated region
  $region10: #{discriminator_cgan_forward.1} parent=0 // pred_check
    _
  $region11: #{discriminator_cgan_forward.1} parent=0 // pred_check_branch
    %17 = sbr.rel (0) target = $region13
  $region12: #{discriminator_cgan_forward.1} parent=0 // pred_region
    _
  $region13: #{discriminator_cgan_forward.1} parent=0 // pred_fallthru
    _
  // Predicated region
  $region14: #{discriminator_cgan_forward.1} parent=0 // pred_check
    _
  $region15: #{discriminator_cgan_forward.1} parent=0 // pred_check_branch
    %19 = sbr.rel (0) target = $region17
  $region16: #{discriminator_cgan_forward.1} parent=0 // pred_region
    _
  $region17: #{discriminator_cgan_forward.1} parent=0 // pred_fallthru
    _
  // Predicated region
  $region18: #{discriminator_cgan_forward.1} parent=0 // pred_check
    _
  $region19: #{discriminator_cgan_forward.1} parent=0 // pred_check_branch
    %21 = sbr.rel (0) target = $region21
  $region20: #{discriminator_cgan_forward.1} parent=0 // pred_region
    _
  $region21: #{discriminator_cgan_forward.1} parent=0 // pred_fallthru
    _
  // Predicated region
  $region22: #{discriminator_cgan_forward.1} parent=0 // pred_check
    _
  $region23: #{discriminator_cgan_forward.1} parent=0 // pred_check_branch
    %23 = sbr.rel (0) target = $region25
  $region24: #{discriminator_cgan_forward.1} parent=0 // pred_region
    _
  $region25: #{discriminator_cgan_forward.1} parent=0 // pred_fallthru
    _
  // Predicated region
  $region26: #{discriminator_cgan_forward.1} parent=0 // pred_check
    _
  $region27: #{discriminator_cgan_forward.1} parent=0 // pred_check_branch
    %25 = sbr.rel (0) target = $region29
  $region28: #{discriminator_cgan_forward.1} parent=0 // pred_region
    _
  $region29: #{discriminator_cgan_forward.1} parent=0 // pred_fallthru
    _
  %v27 = vld [vmem:[%s6] ss:$8 sm:$0xf]
  %s28 = scalar_lea.vmem %s6, 1
  %v29 = vld [vmem:[%s28] ss:$8 sm:$0xf]
  %s30 = scalar_lea.vmem %s6, 2
  %v31 = vld [vmem:[%s30] ss:$8 sm:$0xf]
  %s32 = scalar_lea.vmem %s6, 3
  %v33 = vld [vmem:[%s32] ss:$8 sm:$0xf]
  %v34 = vld [vmem:[%s6 + $0x4] ss:$0 sm:$0xff]
  %v35 = vld [vmem:[%s0] sm:$0xff]
  %v36 = vld [vmem:[%s0 + $0x8] sm:$0xff]
  %v37 = vpack.c.bf16 %v36, %v35
  %v38 = vld [vmem:[%s1] sm:$0xff]
  %v39 = vld [vmem:[%s1 + $0x8] sm:$0xff]
  %v40 = vpack.c.bf16 %v39, %v38
  %v41 = vld [vmem:[%s2] sm:$0xff]
  %v42 = vld [vmem:[%s2 + $0x8] sm:$0xff]
  %v43 = vld [vmem:[%s2 + $0x10] sm:$0xff]
  %v44 = vld [vmem:[%s2 + $0x18] sm:$0xff]
  %v45 = vld [vmem:[%s2 + $0x20] sm:$0xff]
  %v46 = vld [vmem:[%s2 + $0x28] sm:$0xff]
  %v47 = vld [vmem:[%s2 + $0x30] sm:$0xff]
  %v48 = vld [vmem:[%s2 + $0x38] sm:$0xff]
  %v49 = vld [vmem:[%s2 + $0x40] sm:$0xff]
  %v50 = vld [vmem:[%s2 + $0x48] sm:$0xff]
  %v51 = vld [vmem:[%s2 + $0x50] sm:$0xff]
  %v52 = vld [vmem:[%s2 + $0x58] sm:$0xff]
  %v53 = vld [vmem:[%s2 + $0x60] sm:$0xff]
  %v54 = vld [vmem:[%s2 + $0x68] sm:$0xff]
  %v55 = vld [vmem:[%s2 + $0x70] sm:$0xff]
  %v56 = vld [vmem:[%s2 + $0x78] sm:$0xff]
  %v57 = vld [vmem:[%s3] sm:$0xff]
  %v58 = vld [vmem:[%s3 + $0x8] sm:$0xff]
  %v59 = vld [vmem:[%s3 + $0x10] sm:$0xff]
  %v60 = vld [vmem:[%s3 + $0x18] sm:$0xff]
  %v61 = vld [vmem:[%s3 + $0x20] sm:$0xff]
  %v62 = vld [vmem:[%s3 + $0x28] sm:$0xff]
  %v63 = vld [vmem:[%s3 + $0x30] sm:$0xff]
  %v64 = vld [vmem:[%s3 + $0x38] sm:$0xff]
  %v65 = vld [vmem:[%s3 + $0x40] sm:$0xff]
  %v66 = vld [vmem:[%s3 + $0x48] sm:$0xff]
  %v67 = vld [vmem:[%s3 + $0x50] sm:$0xff]
  %v68 = vld [vmem:[%s3 + $0x58] sm:$0xff]
  %v69 = vld [vmem:[%s3 + $0x60] sm:$0xff]
  %v70 = vld [vmem:[%s3 + $0x68] sm:$0xff]
  %v71 = vld [vmem:[%s3 + $0x70] sm:$0xff]
  %v72 = vld [vmem:[%s3 + $0x78] sm:$0xff]
  %v73 = vld [vmem:[%s3 + $0x80] sm:$0xff]
  %v74 = vld [vmem:[%s3 + $0x88] sm:$0xff]
  %v75 = vld [vmem:[%s3 + $0x90] sm:$0xff]
  %v76 = vld [vmem:[%s3 + $0x98] sm:$0xff]
  %v77 = vld [vmem:[%s3 + $0xa0] sm:$0xff]
  %v78 = vld [vmem:[%s3 + $0xa8] sm:$0xff]
  %v79 = vld [vmem:[%s3 + $0xb0] sm:$0xff]
  %v80 = vld [vmem:[%s3 + $0xb8] sm:$0xff]
  %v81 = vld [vmem:[%s3 + $0xc0] sm:$0xff]
  %v82 = vld [vmem:[%s3 + $0xc8] sm:$0xff]
  %v83 = vld [vmem:[%s3 + $0xd0] sm:$0xff]
  %v84 = vld [vmem:[%s3 + $0xd8] sm:$0xff]
  %v85 = vld [vmem:[%s3 + $0xe0] sm:$0xff]
  %v86 = vld [vmem:[%s3 + $0xe8] sm:$0xff]
  %v87 = vld [vmem:[%s3 + $0xf0] sm:$0xff]
  %v88 = vld [vmem:[%s3 + $0xf8] sm:$0xff]
  %v121 = vunpack.c.l.b16 %v57
  %v122 = vunpack.c.h.b16 %v57
  %v123 = vunpack.c.l.b16 %v58
  %v124 = vunpack.c.h.b16 %v58
  %v125 = vunpack.c.l.b16 %v59
  %v126 = vunpack.c.h.b16 %v59
  %v127 = vunpack.c.l.b16 %v60
  %v128 = vunpack.c.h.b16 %v60
  %v129 = vunpack.c.l.b16 %v61
  %v130 = vunpack.c.h.b16 %v61
  %v131 = vunpack.c.l.b16 %v62
  %v132 = vunpack.c.h.b16 %v62
  %v133 = vunpack.c.l.b16 %v63
  %v134 = vunpack.c.h.b16 %v63
  %v135 = vunpack.c.l.b16 %v64
  %v136 = vunpack.c.h.b16 %v64
  %v137 = vunpack.c.l.b16 %v65
  %v138 = vunpack.c.h.b16 %v65
  %v139 = vunpack.c.l.b16 %v66
  %v140 = vunpack.c.h.b16 %v66
  %v141 = vunpack.c.l.b16 %v67
  %v142 = vunpack.c.h.b16 %v67
  %v143 = vunpack.c.l.b16 %v68
  %v144 = vunpack.c.h.b16 %v68
  %v145 = vunpack.c.l.b16 %v69
  %v146 = vunpack.c.h.b16 %v69
  %v147 = vunpack.c.l.b16 %v70
  %v148 = vunpack.c.h.b16 %v70
  %v149 = vunpack.c.l.b16 %v71
  %v150 = vunpack.c.h.b16 %v71
  %v151 = vunpack.c.l.b16 %v72
  %v152 = vunpack.c.h.b16 %v72
  %v153 = vunpack.c.l.b16 %v73
  %v154 = vunpack.c.h.b16 %v73
  %v155 = vunpack.c.l.b16 %v74
  %v156 = vunpack.c.h.b16 %v74
  %v157 = vunpack.c.l.b16 %v75
  %v158 = vunpack.c.h.b16 %v75
  %v159 = vunpack.c.l.b16 %v76
  %v160 = vunpack.c.h.b16 %v76
  %v161 = vunpack.c.l.b16 %v77
  %v162 = vunpack.c.h.b16 %v77
  %v163 = vunpack.c.l.b16 %v78
  %v164 = vunpack.c.h.b16 %v78
  %v165 = vunpack.c.l.b16 %v79
  %v166 = vunpack.c.h.b16 %v79
  %v167 = vunpack.c.l.b16 %v80
  %v168 = vunpack.c.h.b16 %v80
  %v169 = vunpack.c.l.b16 %v81
  %v170 = vunpack.c.h.b16 %v81
  %v171 = vunpack.c.l.b16 %v82
  %v172 = vunpack.c.h.b16 %v82
  %v173 = vunpack.c.l.b16 %v83
  %v174 = vunpack.c.h.b16 %v83
  %v175 = vunpack.c.l.b16 %v84
  %v176 = vunpack.c.h.b16 %v84
  %v177 = vunpack.c.l.b16 %v85
  %v178 = vunpack.c.h.b16 %v85
  %v179 = vunpack.c.l.b16 %v86
  %v180 = vunpack.c.h.b16 %v86
  %v181 = vunpack.c.l.b16 %v87
  %v182 = vunpack.c.h.b16 %v87
  %v183 = vunpack.c.l.b16 %v88
  %v184 = vunpack.c.h.b16 %v88
  %v185 = vpack.c.b16 %v125, %v121
  %v186 = vpack.c.b16 %v126, %v122
  %v187 = vpack.c.b16 %v127, %v123
  %v188 = vpack.c.b16 %v128, %v124
  %v189 = vpack.c.b16 %v133, %v129
  %v190 = vpack.c.b16 %v134, %v130
  %v191 = vpack.c.b16 %v135, %v131
  %v192 = vpack.c.b16 %v136, %v132
  %v193 = vpack.c.b16 %v141, %v137
  %v194 = vpack.c.b16 %v142, %v138
  %v195 = vpack.c.b16 %v143, %v139
  %v196 = vpack.c.b16 %v144, %v140
  %v197 = vpack.c.b16 %v149, %v145
  %v198 = vpack.c.b16 %v150, %v146
  %v199 = vpack.c.b16 %v151, %v147
  %v200 = vpack.c.b16 %v152, %v148
  %v201 = vpack.c.b16 %v157, %v153
  %v202 = vpack.c.b16 %v158, %v154
  %v203 = vpack.c.b16 %v159, %v155
  %v204 = vpack.c.b16 %v160, %v156
  %v205 = vpack.c.b16 %v165, %v161
  %v206 = vpack.c.b16 %v166, %v162
  %v207 = vpack.c.b16 %v167, %v163
  %v208 = vpack.c.b16 %v168, %v164
  %v209 = vpack.c.b16 %v173, %v169
  %v210 = vpack.c.b16 %v174, %v170
  %v211 = vpack.c.b16 %v175, %v171
  %v212 = vpack.c.b16 %v176, %v172
  %v213 = vpack.c.b16 %v181, %v177
  %v214 = vpack.c.b16 %v182, %v178
  %v215 = vpack.c.b16 %v183, %v179
  %v216 = vpack.c.b16 %v184, %v180
  %249 = vmatpush.bf16.msra.mxu0 %v213
  %250 = vmatpush.bf16.msra.mxu0 %v209
  %251 = vmatpush.bf16.msra.mxu0 %v205
  %252 = vmatpush.bf16.msra.mxu0 %v201
  %253 = vmatpush.bf16.msra.mxu0 %v197
  %254 = vmatpush.bf16.msra.mxu0 %v193
  %255 = vmatpush.bf16.msra.mxu0 %v189
  %256 = vmatpush.bf16.msra.mxu0 %v185
  %257 = vmatmul.bf16.gmra.mxu0 %v40
  %v258 = vpop.f32.mrf.mxu0
  %v259 = vadd.f32 0.0, %v258
  %v260 = vpop.f32.mrf.mxu0
  %v261 = vadd.f32 0.0, %v260
  %262 = vdwg.mxu0
  %263 = vmatpush.bf16.msra.mxu0 %v214
  %264 = vmatpush.bf16.msra.mxu0 %v210
  %265 = vmatpush.bf16.msra.mxu0 %v206
  %266 = vmatpush.bf16.msra.mxu0 %v202
  %267 = vmatpush.bf16.msra.mxu0 %v198
  %268 = vmatpush.bf16.msra.mxu0 %v194
  %269 = vmatpush.bf16.msra.mxu0 %v190
  %270 = vmatpush.bf16.msra.mxu0 %v186
  %271 = vmatmul.bf16.gmra.mxu0 %v40
  %v272 = vpop.f32.mrf.mxu0
  %v273 = vadd.f32 0.0, %v272
  %v274 = vpop.f32.mrf.mxu0
  %v275 = vadd.f32 0.0, %v274
  %276 = vdwg.mxu0
  %277 = vmatpush.bf16.msra.mxu0 %v215
  %278 = vmatpush.bf16.msra.mxu0 %v211
  %279 = vmatpush.bf16.msra.mxu0 %v207
  %280 = vmatpush.bf16.msra.mxu0 %v203
  %281 = vmatpush.bf16.msra.mxu0 %v199
  %282 = vmatpush.bf16.msra.mxu0 %v195
  %283 = vmatpush.bf16.msra.mxu0 %v191
  %284 = vmatpush.bf16.msra.mxu0 %v187
  %285 = vmatmul.bf16.gmra.mxu0 %v40
  %v286 = vpop.f32.mrf.mxu0
  %v287 = vadd.f32 0.0, %v286
  %v288 = vpop.f32.mrf.mxu0
  %v289 = vadd.f32 0.0, %v288
  %290 = vdwg.mxu0
  %291 = vmatpush.bf16.msra.mxu0 %v216
  %292 = vmatpush.bf16.msra.mxu0 %v212
  %293 = vmatpush.bf16.msra.mxu0 %v208
  %294 = vmatpush.bf16.msra.mxu0 %v204
  %295 = vmatpush.bf16.msra.mxu0 %v200
  %296 = vmatpush.bf16.msra.mxu0 %v196
  %297 = vmatpush.bf16.msra.mxu0 %v192
  %298 = vmatpush.bf16.msra.mxu0 %v188
  %299 = vmatmul.bf16.gmra.mxu0 %v40
  %v300 = vpop.f32.mrf.mxu0
  %v301 = vadd.f32 0.0, %v300
  %v302 = vpop.f32.mrf.mxu0
  %v303 = vadd.f32 0.0, %v302
  %304 = vdwg.mxu0
  %v321 = vunpack.c.l.b16 %v41
  %v322 = vunpack.c.h.b16 %v41
  %v323 = vunpack.c.l.b16 %v42
  %v324 = vunpack.c.h.b16 %v42
  %v325 = vunpack.c.l.b16 %v43
  %v326 = vunpack.c.h.b16 %v43
  %v327 = vunpack.c.l.b16 %v44
  %v328 = vunpack.c.h.b16 %v44
  %v329 = vunpack.c.l.b16 %v45
  %v330 = vunpack.c.h.b16 %v45
  %v331 = vunpack.c.l.b16 %v46
  %v332 = vunpack.c.h.b16 %v46
  %v333 = vunpack.c.l.b16 %v47
  %v334 = vunpack.c.h.b16 %v47
  %v335 = vunpack.c.l.b16 %v48
  %v336 = vunpack.c.h.b16 %v48
  %v337 = vunpack.c.l.b16 %v49
  %v338 = vunpack.c.h.b16 %v49
  %v339 = vunpack.c.l.b16 %v50
  %v340 = vunpack.c.h.b16 %v50
  %v341 = vunpack.c.l.b16 %v51
  %v342 = vunpack.c.h.b16 %v51
  %v343 = vunpack.c.l.b16 %v52
  %v344 = vunpack.c.h.b16 %v52
  %v345 = vunpack.c.l.b16 %v53
  %v346 = vunpack.c.h.b16 %v53
  %v347 = vunpack.c.l.b16 %v54
  %v348 = vunpack.c.h.b16 %v54
  %v349 = vunpack.c.l.b16 %v55
  %v350 = vunpack.c.h.b16 %v55
  %v351 = vunpack.c.l.b16 %v56
  %v352 = vunpack.c.h.b16 %v56
  %v353 = vpack.c.b16 %v325, %v321
  %v354 = vpack.c.b16 %v326, %v322
  %v355 = vpack.c.b16 %v327, %v323
  %v356 = vpack.c.b16 %v328, %v324
  %v357 = vpack.c.b16 %v333, %v329
  %v358 = vpack.c.b16 %v334, %v330
  %v359 = vpack.c.b16 %v335, %v331
  %v360 = vpack.c.b16 %v336, %v332
  %v361 = vpack.c.b16 %v341, %v337
  %v362 = vpack.c.b16 %v342, %v338
  %v363 = vpack.c.b16 %v343, %v339
  %v364 = vpack.c.b16 %v344, %v340
  %v365 = vpack.c.b16 %v349, %v345
  %v366 = vpack.c.b16 %v350, %v346
  %v367 = vpack.c.b16 %v351, %v347
  %v368 = vpack.c.b16 %v352, %v348
  %vm385 = vcmask 523264
  %v387 = vsel %vm385, %v37, 0
  %389 = vmatpush.bf16.msra.mxu0 0
  %390 = vmatpush.bf16.msra.mxu0 0
  %391 = vmatpush.bf16.msra.mxu0 0
  %392 = vmatpush.bf16.msra.mxu0 0
  %393 = vmatpush.bf16.msra.mxu0 %v365
  %394 = vmatpush.bf16.msra.mxu0 %v361
  %395 = vmatpush.bf16.msra.mxu0 %v357
  %396 = vmatpush.bf16.msra.mxu0 %v353
  %397 = vmatmul.bf16.gmra.mxu0 %v387
  %v398 = vpop.f32.mrf.mxu0
  %v399 = vadd.f32 %v259, %v398
  %v400 = vpop.f32.mrf.mxu0
  %v401 = vadd.f32 %v261, %v400
  %402 = vdwg.mxu0
  %403 = vmatpush.bf16.msra.mxu0 0
  %404 = vmatpush.bf16.msra.mxu0 0
  %405 = vmatpush.bf16.msra.mxu0 0
  %406 = vmatpush.bf16.msra.mxu0 0
  %407 = vmatpush.bf16.msra.mxu0 %v366
  %408 = vmatpush.bf16.msra.mxu0 %v362
  %409 = vmatpush.bf16.msra.mxu0 %v358
  %410 = vmatpush.bf16.msra.mxu0 %v354
  %411 = vmatmul.bf16.gmra.mxu0 %v387
  %v412 = vpop.f32.mrf.mxu0
  %v413 = vadd.f32 %v273, %v412
  %v414 = vpop.f32.mrf.mxu0
  %v415 = vadd.f32 %v275, %v414
  %416 = vdwg.mxu0
  %417 = vmatpush.bf16.msra.mxu0 0
  %418 = vmatpush.bf16.msra.mxu0 0
  %419 = vmatpush.bf16.msra.mxu0 0
  %420 = vmatpush.bf16.msra.mxu0 0
  %421 = vmatpush.bf16.msra.mxu0 %v367
  %422 = vmatpush.bf16.msra.mxu0 %v363
  %423 = vmatpush.bf16.msra.mxu0 %v359
  %424 = vmatpush.bf16.msra.mxu0 %v355
  %425 = vmatmul.bf16.gmra.mxu0 %v387
  %v426 = vpop.f32.mrf.mxu0
  %v427 = vadd.f32 %v287, %v426
  %v428 = vpop.f32.mrf.mxu0
  %v429 = vadd.f32 %v289, %v428
  %430 = vdwg.mxu0
  %431 = vmatpush.bf16.msra.mxu0 0
  %432 = vmatpush.bf16.msra.mxu0 0
  %433 = vmatpush.bf16.msra.mxu0 0
  %434 = vmatpush.bf16.msra.mxu0 0
  %435 = vmatpush.bf16.msra.mxu0 %v368
  %436 = vmatpush.bf16.msra.mxu0 %v364
  %437 = vmatpush.bf16.msra.mxu0 %v360
  %438 = vmatpush.bf16.msra.mxu0 %v356
  %439 = vmatmul.bf16.gmra.mxu0 %v387
  %v440 = vpop.f32.mrf.mxu0
  %v441 = vadd.f32 %v301, %v440
  %v442 = vpop.f32.mrf.mxu0
  %v443 = vadd.f32 %v303, %v442
  %444 = vdwg.mxu0
  %v446 = vperm.slane %v27, 0
  %v447 = vperm.slane %v27, 1
  %v448 = vperm.slane %v27, 2
  %v449 = vperm.slane %v27, 3
  %v454 = vadd.f32 %v399, %v446
  %v455 = vadd.f32 %v413, %v447
  %v456 = vadd.f32 %v427, %v448
  %v457 = vadd.f32 %v441, %v449
  %v458 = vadd.f32 %v401, %v446
  %v459 = vadd.f32 %v415, %v447
  %v460 = vadd.f32 %v429, %v448
  %v461 = vadd.f32 %v443, %v449
  %vm462 = vcmp.gt.f32.partialorder %v454, 0.0
  %vm463 = vcmp.gt.f32.partialorder %v455, 0.0
  %vm464 = vcmp.gt.f32.partialorder %v456, 0.0
  %vm465 = vcmp.gt.f32.partialorder %v457, 0.0
  %vm466 = vcmp.gt.f32.partialorder %v458, 0.0
  %vm467 = vcmp.gt.f32.partialorder %v459, 0.0
  %vm468 = vcmp.gt.f32.partialorder %v460, 0.0
  %vm469 = vcmp.gt.f32.partialorder %v461, 0.0
  %v470 = vmul.f32 %v454, 0.2
  %v471 = vmul.f32 %v455, 0.2
  %v472 = vmul.f32 %v456, 0.2
  %v473 = vmul.f32 %v457, 0.2
  %v474 = vmul.f32 %v458, 0.2
  %v475 = vmul.f32 %v459, 0.2
  %v476 = vmul.f32 %v460, 0.2
  %v477 = vmul.f32 %v461, 0.2
  %v478 = vsel %vm462, %v454, %v470
  %v479 = vsel %vm463, %v455, %v471
  %v480 = vsel %vm464, %v456, %v472
  %v481 = vsel %vm465, %v457, %v473
  %v482 = vsel %vm466, %v458, %v474
  %v483 = vsel %vm467, %v459, %v475
  %v484 = vsel %vm468, %v460, %v476
  %v485 = vsel %vm469, %v461, %v477
  %v486 = vpack.c.bf16 %v482, %v478
  %v487 = vpack.c.bf16 %v483, %v479
  %v488 = vpack.c.bf16 %v484, %v480
  %v489 = vpack.c.bf16 %v485, %v481
  %v490 = vld [vmem:[%s4] sm:$0xff]
  %v491 = vld [vmem:[%s4 + $0x8] sm:$0xff]
  %v492 = vld [vmem:[%s4 + $0x10] sm:$0xff]
  %v493 = vld [vmem:[%s4 + $0x18] sm:$0xff]
  %v494 = vld [vmem:[%s4 + $0x20] sm:$0xff]
  %v495 = vld [vmem:[%s4 + $0x28] sm:$0xff]
  %v496 = vld [vmem:[%s4 + $0x30] sm:$0xff]
  %v497 = vld [vmem:[%s4 + $0x38] sm:$0xff]
  %v498 = vld [vmem:[%s4 + $0x40] sm:$0xff]
  %v499 = vld [vmem:[%s4 + $0x48] sm:$0xff]
  %v500 = vld [vmem:[%s4 + $0x50] sm:$0xff]
  %v501 = vld [vmem:[%s4 + $0x58] sm:$0xff]
  %v502 = vld [vmem:[%s4 + $0x60] sm:$0xff]
  %v503 = vld [vmem:[%s4 + $0x68] sm:$0xff]
  %v504 = vld [vmem:[%s4 + $0x70] sm:$0xff]
  %v505 = vld [vmem:[%s4 + $0x78] sm:$0xff]
  %v506 = vld [vmem:[%s4 + $0x80] sm:$0xff]
  %v507 = vld [vmem:[%s4 + $0x88] sm:$0xff]
  %v508 = vld [vmem:[%s4 + $0x90] sm:$0xff]
  %v509 = vld [vmem:[%s4 + $0x98] sm:$0xff]
  %v510 = vld [vmem:[%s4 + $0xa0] sm:$0xff]
  %v511 = vld [vmem:[%s4 + $0xa8] sm:$0xff]
  %v512 = vld [vmem:[%s4 + $0xb0] sm:$0xff]
  %v513 = vld [vmem:[%s4 + $0xb8] sm:$0xff]
  %v514 = vld [vmem:[%s4 + $0xc0] sm:$0xff]
  %v515 = vld [vmem:[%s4 + $0xc8] sm:$0xff]
  %v516 = vld [vmem:[%s4 + $0xd0] sm:$0xff]
  %v517 = vld [vmem:[%s4 + $0xd8] sm:$0xff]
  %v518 = vld [vmem:[%s4 + $0xe0] sm:$0xff]
  %v519 = vld [vmem:[%s4 + $0xe8] sm:$0xff]
  %v520 = vld [vmem:[%s4 + $0xf0] sm:$0xff]
  %v521 = vld [vmem:[%s4 + $0xf8] sm:$0xff]
  %v522 = vld [vmem:[%s4 + $0x100] sm:$0xff]
  %v523 = vld [vmem:[%s4 + $0x108] sm:$0xff]
  %v524 = vld [vmem:[%s4 + $0x110] sm:$0xff]
  %v525 = vld [vmem:[%s4 + $0x118] sm:$0xff]
  %v526 = vld [vmem:[%s4 + $0x120] sm:$0xff]
  %v527 = vld [vmem:[%s4 + $0x128] sm:$0xff]
  %v528 = vld [vmem:[%s4 + $0x130] sm:$0xff]
  %v529 = vld [vmem:[%s4 + $0x138] sm:$0xff]
  %v530 = vld [vmem:[%s4 + $0x140] sm:$0xff]
  %v531 = vld [vmem:[%s4 + $0x148] sm:$0xff]
  %v532 = vld [vmem:[%s4 + $0x150] sm:$0xff]
  %v533 = vld [vmem:[%s4 + $0x158] sm:$0xff]
  %v534 = vld [vmem:[%s4 + $0x160] sm:$0xff]
  %v535 = vld [vmem:[%s4 + $0x168] sm:$0xff]
  %v536 = vld [vmem:[%s4 + $0x170] sm:$0xff]
  %v537 = vld [vmem:[%s4 + $0x178] sm:$0xff]
  %v538 = vld [vmem:[%s4 + $0x180] sm:$0xff]
  %v539 = vld [vmem:[%s4 + $0x188] sm:$0xff]
  %v540 = vld [vmem:[%s4 + $0x190] sm:$0xff]
  %v541 = vld [vmem:[%s4 + $0x198] sm:$0xff]
  %v542 = vld [vmem:[%s4 + $0x1a0] sm:$0xff]
  %v543 = vld [vmem:[%s4 + $0x1a8] sm:$0xff]
  %v544 = vld [vmem:[%s4 + $0x1b0] sm:$0xff]
  %v545 = vld [vmem:[%s4 + $0x1b8] sm:$0xff]
  %v546 = vld [vmem:[%s4 + $0x1c0] sm:$0xff]
  %v547 = vld [vmem:[%s4 + $0x1c8] sm:$0xff]
  %v548 = vld [vmem:[%s4 + $0x1d0] sm:$0xff]
  %v549 = vld [vmem:[%s4 + $0x1d8] sm:$0xff]
  %v550 = vld [vmem:[%s4 + $0x1e0] sm:$0xff]
  %v551 = vld [vmem:[%s4 + $0x1e8] sm:$0xff]
  %v552 = vld [vmem:[%s4 + $0x1f0] sm:$0xff]
  %v553 = vld [vmem:[%s4 + $0x1f8] sm:$0xff]
  %v554 = vld [vmem:[%s4 + $0x200] sm:$0xff]
  %v555 = vld [vmem:[%s4 + $0x208] sm:$0xff]
  %v556 = vld [vmem:[%s4 + $0x210] sm:$0xff]
  %v557 = vld [vmem:[%s4 + $0x218] sm:$0xff]
  %v558 = vld [vmem:[%s4 + $0x220] sm:$0xff]
  %v559 = vld [vmem:[%s4 + $0x228] sm:$0xff]
  %v560 = vld [vmem:[%s4 + $0x230] sm:$0xff]
  %v561 = vld [vmem:[%s4 + $0x238] sm:$0xff]
  %v562 = vld [vmem:[%s4 + $0x240] sm:$0xff]
  %v563 = vld [vmem:[%s4 + $0x248] sm:$0xff]
  %v564 = vld [vmem:[%s4 + $0x250] sm:$0xff]
  %v565 = vld [vmem:[%s4 + $0x258] sm:$0xff]
  %v566 = vld [vmem:[%s4 + $0x260] sm:$0xff]
  %v567 = vld [vmem:[%s4 + $0x268] sm:$0xff]
  %v568 = vld [vmem:[%s4 + $0x270] sm:$0xff]
  %v569 = vld [vmem:[%s4 + $0x278] sm:$0xff]
  %v570 = vld [vmem:[%s4 + $0x280] sm:$0xff]
  %v571 = vld [vmem:[%s4 + $0x288] sm:$0xff]
  %v572 = vld [vmem:[%s4 + $0x290] sm:$0xff]
  %v573 = vld [vmem:[%s4 + $0x298] sm:$0xff]
  %v574 = vld [vmem:[%s4 + $0x2a0] sm:$0xff]
  %v575 = vld [vmem:[%s4 + $0x2a8] sm:$0xff]
  %v576 = vld [vmem:[%s4 + $0x2b0] sm:$0xff]
  %v577 = vld [vmem:[%s4 + $0x2b8] sm:$0xff]
  %v578 = vld [vmem:[%s4 + $0x2c0] sm:$0xff]
  %v579 = vld [vmem:[%s4 + $0x2c8] sm:$0xff]
  %v580 = vld [vmem:[%s4 + $0x2d0] sm:$0xff]
  %v581 = vld [vmem:[%s4 + $0x2d8] sm:$0xff]
  %v582 = vld [vmem:[%s4 + $0x2e0] sm:$0xff]
  %v583 = vld [vmem:[%s4 + $0x2e8] sm:$0xff]
  %v584 = vld [vmem:[%s4 + $0x2f0] sm:$0xff]
  %v585 = vld [vmem:[%s4 + $0x2f8] sm:$0xff]
  %v586 = vld [vmem:[%s4 + $0x300] sm:$0xff]
  %v587 = vld [vmem:[%s4 + $0x308] sm:$0xff]
  %v588 = vld [vmem:[%s4 + $0x310] sm:$0xff]
  %v589 = vld [vmem:[%s4 + $0x318] sm:$0xff]
  %v590 = vld [vmem:[%s4 + $0x320] sm:$0xff]
  %v591 = vld [vmem:[%s4 + $0x328] sm:$0xff]
  %v592 = vld [vmem:[%s4 + $0x330] sm:$0xff]
  %v593 = vld [vmem:[%s4 + $0x338] sm:$0xff]
  %v594 = vld [vmem:[%s4 + $0x340] sm:$0xff]
  %v595 = vld [vmem:[%s4 + $0x348] sm:$0xff]
  %v596 = vld [vmem:[%s4 + $0x350] sm:$0xff]
  %v597 = vld [vmem:[%s4 + $0x358] sm:$0xff]
  %v598 = vld [vmem:[%s4 + $0x360] sm:$0xff]
  %v599 = vld [vmem:[%s4 + $0x368] sm:$0xff]
  %v600 = vld [vmem:[%s4 + $0x370] sm:$0xff]
  %v601 = vld [vmem:[%s4 + $0x378] sm:$0xff]
  %v602 = vld [vmem:[%s4 + $0x380] sm:$0xff]
  %v603 = vld [vmem:[%s4 + $0x388] sm:$0xff]
  %v604 = vld [vmem:[%s4 + $0x390] sm:$0xff]
  %v605 = vld [vmem:[%s4 + $0x398] sm:$0xff]
  %v606 = vld [vmem:[%s4 + $0x3a0] sm:$0xff]
  %v607 = vld [vmem:[%s4 + $0x3a8] sm:$0xff]
  %v608 = vld [vmem:[%s4 + $0x3b0] sm:$0xff]
  %v609 = vld [vmem:[%s4 + $0x3b8] sm:$0xff]
  %v610 = vld [vmem:[%s4 + $0x3c0] sm:$0xff]
  %v611 = vld [vmem:[%s4 + $0x3c8] sm:$0xff]
  %v612 = vld [vmem:[%s4 + $0x3d0] sm:$0xff]
  %v613 = vld [vmem:[%s4 + $0x3d8] sm:$0xff]
  %v614 = vld [vmem:[%s4 + $0x3e0] sm:$0xff]
  %v615 = vld [vmem:[%s4 + $0x3e8] sm:$0xff]
  %v616 = vld [vmem:[%s4 + $0x3f0] sm:$0xff]
  %v617 = vld [vmem:[%s4 + $0x3f8] sm:$0xff]
  %v619 = vperm.slane %v29, 0
  %v620 = vperm.slane %v29, 1
  %v621 = vperm.slane %v29, 2
  %v622 = vperm.slane %v29, 3
  %v755 = vunpack.c.l.b16 %v490
  %v756 = vunpack.c.h.b16 %v490
  %v757 = vunpack.c.l.b16 %v491
  %v758 = vunpack.c.h.b16 %v491
  %v759 = vunpack.c.l.b16 %v492
  %v760 = vunpack.c.h.b16 %v492
  %v761 = vunpack.c.l.b16 %v493
  %v762 = vunpack.c.h.b16 %v493
  %v763 = vunpack.c.l.b16 %v494
  %v764 = vunpack.c.h.b16 %v494
  %v765 = vunpack.c.l.b16 %v495
  %v766 = vunpack.c.h.b16 %v495
  %v767 = vunpack.c.l.b16 %v496
  %v768 = vunpack.c.h.b16 %v496
  %v769 = vunpack.c.l.b16 %v497
  %v770 = vunpack.c.h.b16 %v497
  %v771 = vunpack.c.l.b16 %v498
  %v772 = vunpack.c.h.b16 %v498
  %v773 = vunpack.c.l.b16 %v499
  %v774 = vunpack.c.h.b16 %v499
  %v775 = vunpack.c.l.b16 %v500
  %v776 = vunpack.c.h.b16 %v500
  %v777 = vunpack.c.l.b16 %v501
  %v778 = vunpack.c.h.b16 %v501
  %v779 = vunpack.c.l.b16 %v502
  %v780 = vunpack.c.h.b16 %v502
  %v781 = vunpack.c.l.b16 %v503
  %v782 = vunpack.c.h.b16 %v503
  %v783 = vunpack.c.l.b16 %v504
  %v784 = vunpack.c.h.b16 %v504
  %v785 = vunpack.c.l.b16 %v505
  %v786 = vunpack.c.h.b16 %v505
  %v787 = vunpack.c.l.b16 %v506
  %v788 = vunpack.c.h.b16 %v506
  %v789 = vunpack.c.l.b16 %v507
  %v790 = vunpack.c.h.b16 %v507
  %v791 = vunpack.c.l.b16 %v508
  %v792 = vunpack.c.h.b16 %v508
  %v793 = vunpack.c.l.b16 %v509
  %v794 = vunpack.c.h.b16 %v509
  %v795 = vunpack.c.l.b16 %v510
  %v796 = vunpack.c.h.b16 %v510
  %v797 = vunpack.c.l.b16 %v511
  %v798 = vunpack.c.h.b16 %v511
  %v799 = vunpack.c.l.b16 %v512
  %v800 = vunpack.c.h.b16 %v512
  %v801 = vunpack.c.l.b16 %v513
  %v802 = vunpack.c.h.b16 %v513
  %v803 = vunpack.c.l.b16 %v514
  %v804 = vunpack.c.h.b16 %v514
  %v805 = vunpack.c.l.b16 %v515
  %v806 = vunpack.c.h.b16 %v515
  %v807 = vunpack.c.l.b16 %v516
  %v808 = vunpack.c.h.b16 %v516
  %v809 = vunpack.c.l.b16 %v517
  %v810 = vunpack.c.h.b16 %v517
  %v811 = vunpack.c.l.b16 %v518
  %v812 = vunpack.c.h.b16 %v518
  %v813 = vunpack.c.l.b16 %v519
  %v814 = vunpack.c.h.b16 %v519
  %v815 = vunpack.c.l.b16 %v520
  %v816 = vunpack.c.h.b16 %v520
  %v817 = vunpack.c.l.b16 %v521
  %v818 = vunpack.c.h.b16 %v521
  %v819 = vunpack.c.l.b16 %v522
  %v820 = vunpack.c.h.b16 %v522
  %v821 = vunpack.c.l.b16 %v523
  %v822 = vunpack.c.h.b16 %v523
  %v823 = vunpack.c.l.b16 %v524
  %v824 = vunpack.c.h.b16 %v524
  %v825 = vunpack.c.l.b16 %v525
  %v826 = vunpack.c.h.b16 %v525
  %v827 = vunpack.c.l.b16 %v526
  %v828 = vunpack.c.h.b16 %v526
  %v829 = vunpack.c.l.b16 %v527
  %v830 = vunpack.c.h.b16 %v527
  %v831 = vunpack.c.l.b16 %v528
  %v832 = vunpack.c.h.b16 %v528
  %v833 = vunpack.c.l.b16 %v529
  %v834 = vunpack.c.h.b16 %v529
  %v835 = vunpack.c.l.b16 %v530
  %v836 = vunpack.c.h.b16 %v530
  %v837 = vunpack.c.l.b16 %v531
  %v838 = vunpack.c.h.b16 %v531
  %v839 = vunpack.c.l.b16 %v532
  %v840 = vunpack.c.h.b16 %v532
  %v841 = vunpack.c.l.b16 %v533
  %v842 = vunpack.c.h.b16 %v533
  %v843 = vunpack.c.l.b16 %v534
  %v844 = vunpack.c.h.b16 %v534
  %v845 = vunpack.c.l.b16 %v535
  %v846 = vunpack.c.h.b16 %v535
  %v847 = vunpack.c.l.b16 %v536
  %v848 = vunpack.c.h.b16 %v536
  %v849 = vunpack.c.l.b16 %v537
  %v850 = vunpack.c.h.b16 %v537
  %v851 = vunpack.c.l.b16 %v538
  %v852 = vunpack.c.h.b16 %v538
  %v853 = vunpack.c.l.b16 %v539
  %v854 = vunpack.c.h.b16 %v539
  %v855 = vunpack.c.l.b16 %v540
  %v856 = vunpack.c.h.b16 %v540
  %v857 = vunpack.c.l.b16 %v541
  %v858 = vunpack.c.h.b16 %v541
  %v859 = vunpack.c.l.b16 %v542
  %v860 = vunpack.c.h.b16 %v542
  %v861 = vunpack.c.l.b16 %v543
  %v862 = vunpack.c.h.b16 %v543
  %v863 = vunpack.c.l.b16 %v544
  %v864 = vunpack.c.h.b16 %v544
  %v865 = vunpack.c.l.b16 %v545
  %v866 = vunpack.c.h.b16 %v545
  %v867 = vunpack.c.l.b16 %v546
  %v868 = vunpack.c.h.b16 %v546
  %v869 = vunpack.c.l.b16 %v547
  %v870 = vunpack.c.h.b16 %v547
  %v871 = vunpack.c.l.b16 %v548
  %v872 = vunpack.c.h.b16 %v548
  %v873 = vunpack.c.l.b16 %v549
  %v874 = vunpack.c.h.b16 %v549
  %v875 = vunpack.c.l.b16 %v550
  %v876 = vunpack.c.h.b16 %v550
  %v877 = vunpack.c.l.b16 %v551
  %v878 = vunpack.c.h.b16 %v551
  %v879 = vunpack.c.l.b16 %v552
  %v880 = vunpack.c.h.b16 %v552
  %v881 = vunpack.c.l.b16 %v553
  %v882 = vunpack.c.h.b16 %v553
  %v883 = vunpack.c.l.b16 %v554
  %v884 = vunpack.c.h.b16 %v554
  %v885 = vunpack.c.l.b16 %v555
  %v886 = vunpack.c.h.b16 %v555
  %v887 = vunpack.c.l.b16 %v556
  %v888 = vunpack.c.h.b16 %v556
  %v889 = vunpack.c.l.b16 %v557
  %v890 = vunpack.c.h.b16 %v557
  %v891 = vunpack.c.l.b16 %v558
  %v892 = vunpack.c.h.b16 %v558
  %v893 = vunpack.c.l.b16 %v559
  %v894 = vunpack.c.h.b16 %v559
  %v895 = vunpack.c.l.b16 %v560
  %v896 = vunpack.c.h.b16 %v560
  %v897 = vunpack.c.l.b16 %v561
  %v898 = vunpack.c.h.b16 %v561
  %v899 = vunpack.c.l.b16 %v562
  %v900 = vunpack.c.h.b16 %v562
  %v901 = vunpack.c.l.b16 %v563
  %v902 = vunpack.c.h.b16 %v563
  %v903 = vunpack.c.l.b16 %v564
  %v904 = vunpack.c.h.b16 %v564
  %v905 = vunpack.c.l.b16 %v565
  %v906 = vunpack.c.h.b16 %v565
  %v907 = vunpack.c.l.b16 %v566
  %v908 = vunpack.c.h.b16 %v566
  %v909 = vunpack.c.l.b16 %v567
  %v910 = vunpack.c.h.b16 %v567
  %v911 = vunpack.c.l.b16 %v568
  %v912 = vunpack.c.h.b16 %v568
  %v913 = vunpack.c.l.b16 %v569
  %v914 = vunpack.c.h.b16 %v569
  %v915 = vunpack.c.l.b16 %v570
  %v916 = vunpack.c.h.b16 %v570
  %v917 = vunpack.c.l.b16 %v571
  %v918 = vunpack.c.h.b16 %v571
  %v919 = vunpack.c.l.b16 %v572
  %v920 = vunpack.c.h.b16 %v572
  %v921 = vunpack.c.l.b16 %v573
  %v922 = vunpack.c.h.b16 %v573
  %v923 = vunpack.c.l.b16 %v574
  %v924 = vunpack.c.h.b16 %v574
  %v925 = vunpack.c.l.b16 %v575
  %v926 = vunpack.c.h.b16 %v575
  %v927 = vunpack.c.l.b16 %v576
  %v928 = vunpack.c.h.b16 %v576
  %v929 = vunpack.c.l.b16 %v577
  %v930 = vunpack.c.h.b16 %v577
  %v931 = vunpack.c.l.b16 %v578
  %v932 = vunpack.c.h.b16 %v578
  %v933 = vunpack.c.l.b16 %v579
  %v934 = vunpack.c.h.b16 %v579
  %v935 = vunpack.c.l.b16 %v580
  %v936 = vunpack.c.h.b16 %v580
  %v937 = vunpack.c.l.b16 %v581
  %v938 = vunpack.c.h.b16 %v581
  %v939 = vunpack.c.l.b16 %v582
  %v940 = vunpack.c.h.b16 %v582
  %v941 = vunpack.c.l.b16 %v583
  %v942 = vunpack.c.h.b16 %v583
  %v943 = vunpack.c.l.b16 %v584
  %v944 = vunpack.c.h.b16 %v584
  %v945 = vunpack.c.l.b16 %v585
  %v946 = vunpack.c.h.b16 %v585
  %v947 = vunpack.c.l.b16 %v586
  %v948 = vunpack.c.h.b16 %v586
  %v949 = vunpack.c.l.b16 %v587
  %v950 = vunpack.c.h.b16 %v587
  %v951 = vunpack.c.l.b16 %v588
  %v952 = vunpack.c.h.b16 %v588
  %v953 = vunpack.c.l.b16 %v589
  %v954 = vunpack.c.h.b16 %v589
  %v955 = vunpack.c.l.b16 %v590
  %v956 = vunpack.c.h.b16 %v590
  %v957 = vunpack.c.l.b16 %v591
  %v958 = vunpack.c.h.b16 %v591
  %v959 = vunpack.c.l.b16 %v592
  %v960 = vunpack.c.h.b16 %v592
  %v961 = vunpack.c.l.b16 %v593
  %v962 = vunpack.c.h.b16 %v593
  %v963 = vunpack.c.l.b16 %v594
  %v964 = vunpack.c.h.b16 %v594
  %v965 = vunpack.c.l.b16 %v595
  %v966 = vunpack.c.h.b16 %v595
  %v967 = vunpack.c.l.b16 %v596
  %v968 = vunpack.c.h.b16 %v596
  %v969 = vunpack.c.l.b16 %v597
  %v970 = vunpack.c.h.b16 %v597
  %v971 = vunpack.c.l.b16 %v598
  %v972 = vunpack.c.h.b16 %v598
  %v973 = vunpack.c.l.b16 %v599
  %v974 = vunpack.c.h.b16 %v599
  %v975 = vunpack.c.l.b16 %v600
  %v976 = vunpack.c.h.b16 %v600
  %v977 = vunpack.c.l.b16 %v601
  %v978 = vunpack.c.h.b16 %v601
  %v979 = vunpack.c.l.b16 %v602
  %v980 = vunpack.c.h.b16 %v602
  %v981 = vunpack.c.l.b16 %v603
  %v982 = vunpack.c.h.b16 %v603
  %v983 = vunpack.c.l.b16 %v604
  %v984 = vunpack.c.h.b16 %v604
  %v985 = vunpack.c.l.b16 %v605
  %v986 = vunpack.c.h.b16 %v605
  %v987 = vunpack.c.l.b16 %v606
  %v988 = vunpack.c.h.b16 %v606
  %v989 = vunpack.c.l.b16 %v607
  %v990 = vunpack.c.h.b16 %v607
  %v991 = vunpack.c.l.b16 %v608
  %v992 = vunpack.c.h.b16 %v608
  %v993 = vunpack.c.l.b16 %v609
  %v994 = vunpack.c.h.b16 %v609
  %v995 = vunpack.c.l.b16 %v610
  %v996 = vunpack.c.h.b16 %v610
  %v997 = vunpack.c.l.b16 %v611
  %v998 = vunpack.c.h.b16 %v611
  %v999 = vunpack.c.l.b16 %v612
  %v1000 = vunpack.c.h.b16 %v612
  %v1001 = vunpack.c.l.b16 %v613
  %v1002 = vunpack.c.h.b16 %v613
  %v1003 = vunpack.c.l.b16 %v614
  %v1004 = vunpack.c.h.b16 %v614
  %v1005 = vunpack.c.l.b16 %v615
  %v1006 = vunpack.c.h.b16 %v615
  %v1007 = vunpack.c.l.b16 %v616
  %v1008 = vunpack.c.h.b16 %v616
  %v1009 = vunpack.c.l.b16 %v617
  %v1010 = vunpack.c.h.b16 %v617
  %v1011 = vpack.c.b16 %v759, %v755
  %v1012 = vpack.c.b16 %v760, %v756
  %v1013 = vpack.c.b16 %v761, %v757
  %v1014 = vpack.c.b16 %v762, %v758
  %v1015 = vpack.c.b16 %v767, %v763
  %v1016 = vpack.c.b16 %v768, %v764
  %v1017 = vpack.c.b16 %v769, %v765
  %v1018 = vpack.c.b16 %v770, %v766
  %v1019 = vpack.c.b16 %v775, %v771
  %v1020 = vpack.c.b16 %v776, %v772
  %v1021 = vpack.c.b16 %v777, %v773
  %v1022 = vpack.c.b16 %v778, %v774
  %v1023 = vpack.c.b16 %v783, %v779
  %v1024 = vpack.c.b16 %v784, %v780
  %v1025 = vpack.c.b16 %v785, %v781
  %v1026 = vpack.c.b16 %v786, %v782
  %v1027 = vpack.c.b16 %v791, %v787
  %v1028 = vpack.c.b16 %v792, %v788
  %v1029 = vpack.c.b16 %v793, %v789
  %v1030 = vpack.c.b16 %v794, %v790
  %v1031 = vpack.c.b16 %v799, %v795
  %v1032 = vpack.c.b16 %v800, %v796
  %v1033 = vpack.c.b16 %v801, %v797
  %v1034 = vpack.c.b16 %v802, %v798
  %v1035 = vpack.c.b16 %v807, %v803
  %v1036 = vpack.c.b16 %v808, %v804
  %v1037 = vpack.c.b16 %v809, %v805
  %v1038 = vpack.c.b16 %v810, %v806
  %v1039 = vpack.c.b16 %v815, %v811
  %v1040 = vpack.c.b16 %v816, %v812
  %v1041 = vpack.c.b16 %v817, %v813
  %v1042 = vpack.c.b16 %v818, %v814
  %v1043 = vpack.c.b16 %v823, %v819
  %v1044 = vpack.c.b16 %v824, %v820
  %v1045 = vpack.c.b16 %v825, %v821
  %v1046 = vpack.c.b16 %v826, %v822
  %v1047 = vpack.c.b16 %v831, %v827
  %v1048 = vpack.c.b16 %v832, %v828
  %v1049 = vpack.c.b16 %v833, %v829
  %v1050 = vpack.c.b16 %v834, %v830
  %v1051 = vpack.c.b16 %v839, %v835
  %v1052 = vpack.c.b16 %v840, %v836
  %v1053 = vpack.c.b16 %v841, %v837
  %v1054 = vpack.c.b16 %v842, %v838
  %v1055 = vpack.c.b16 %v847, %v843
  %v1056 = vpack.c.b16 %v848, %v844
  %v1057 = vpack.c.b16 %v849, %v845
  %v1058 = vpack.c.b16 %v850, %v846
  %v1059 = vpack.c.b16 %v855, %v851
  %v1060 = vpack.c.b16 %v856, %v852
  %v1061 = vpack.c.b16 %v857, %v853
  %v1062 = vpack.c.b16 %v858, %v854
  %v1063 = vpack.c.b16 %v863, %v859
  %v1064 = vpack.c.b16 %v864, %v860
  %v1065 = vpack.c.b16 %v865, %v861
  %v1066 = vpack.c.b16 %v866, %v862
  %v1067 = vpack.c.b16 %v871, %v867
  %v1068 = vpack.c.b16 %v872, %v868
  %v1069 = vpack.c.b16 %v873, %v869
  %v1070 = vpack.c.b16 %v874, %v870
  %v1071 = vpack.c.b16 %v879, %v875
  %v1072 = vpack.c.b16 %v880, %v876
  %v1073 = vpack.c.b16 %v881, %v877
  %v1074 = vpack.c.b16 %v882, %v878
  %v1075 = vpack.c.b16 %v887, %v883
  %v1076 = vpack.c.b16 %v888, %v884
  %v1077 = vpack.c.b16 %v889, %v885
  %v1078 = vpack.c.b16 %v890, %v886
  %v1079 = vpack.c.b16 %v895, %v891
  %v1080 = vpack.c.b16 %v896, %v892
  %v1081 = vpack.c.b16 %v897, %v893
  %v1082 = vpack.c.b16 %v898, %v894
  %v1083 = vpack.c.b16 %v903, %v899
  %v1084 = vpack.c.b16 %v904, %v900
  %v1085 = vpack.c.b16 %v905, %v901
  %v1086 = vpack.c.b16 %v906, %v902
  %v1087 = vpack.c.b16 %v911, %v907
  %v1088 = vpack.c.b16 %v912, %v908
  %v1089 = vpack.c.b16 %v913, %v909
  %v1090 = vpack.c.b16 %v914, %v910
  %v1091 = vpack.c.b16 %v919, %v915
  %v1092 = vpack.c.b16 %v920, %v916
  %v1093 = vpack.c.b16 %v921, %v917
  %v1094 = vpack.c.b16 %v922, %v918
  %v1095 = vpack.c.b16 %v927, %v923
  %v1096 = vpack.c.b16 %v928, %v924
  %v1097 = vpack.c.b16 %v929, %v925
  %v1098 = vpack.c.b16 %v930, %v926
  %v1099 = vpack.c.b16 %v935, %v931
  %v1100 = vpack.c.b16 %v936, %v932
  %v1101 = vpack.c.b16 %v937, %v933
  %v1102 = vpack.c.b16 %v938, %v934
  %v1103 = vpack.c.b16 %v943, %v939
  %v1104 = vpack.c.b16 %v944, %v940
  %v1105 = vpack.c.b16 %v945, %v941
  %v1106 = vpack.c.b16 %v946, %v942
  %v1107 = vpack.c.b16 %v951, %v947
  %v1108 = vpack.c.b16 %v952, %v948
  %v1109 = vpack.c.b16 %v953, %v949
  %v1110 = vpack.c.b16 %v954, %v950
  %v1111 = vpack.c.b16 %v959, %v955
  %v1112 = vpack.c.b16 %v960, %v956
  %v1113 = vpack.c.b16 %v961, %v957
  %v1114 = vpack.c.b16 %v962, %v958
  %v1115 = vpack.c.b16 %v967, %v963
  %v1116 = vpack.c.b16 %v968, %v964
  %v1117 = vpack.c.b16 %v969, %v965
  %v1118 = vpack.c.b16 %v970, %v966
  %v1119 = vpack.c.b16 %v975, %v971
  %v1120 = vpack.c.b16 %v976, %v972
  %v1121 = vpack.c.b16 %v977, %v973
  %v1122 = vpack.c.b16 %v978, %v974
  %v1123 = vpack.c.b16 %v983, %v979
  %v1124 = vpack.c.b16 %v984, %v980
  %v1125 = vpack.c.b16 %v985, %v981
  %v1126 = vpack.c.b16 %v986, %v982
  %v1127 = vpack.c.b16 %v991, %v987
  %v1128 = vpack.c.b16 %v992, %v988
  %v1129 = vpack.c.b16 %v993, %v989
  %v1130 = vpack.c.b16 %v994, %v990
  %v1131 = vpack.c.b16 %v999, %v995
  %v1132 = vpack.c.b16 %v1000, %v996
  %v1133 = vpack.c.b16 %v1001, %v997
  %v1134 = vpack.c.b16 %v1002, %v998
  %v1135 = vpack.c.b16 %v1007, %v1003
  %v1136 = vpack.c.b16 %v1008, %v1004
  %v1137 = vpack.c.b16 %v1009, %v1005
  %v1138 = vpack.c.b16 %v1010, %v1006
  %1267 = vmatpush.bf16.msra.mxu0 %v1039
  %1268 = vmatpush.bf16.msra.mxu0 %v1035
  %1269 = vmatpush.bf16.msra.mxu0 %v1031
  %1270 = vmatpush.bf16.msra.mxu0 %v1027
  %1271 = vmatpush.bf16.msra.mxu0 %v1023
  %1272 = vmatpush.bf16.msra.mxu0 %v1019
  %1273 = vmatpush.bf16.msra.mxu0 %v1015
  %1274 = vmatpush.bf16.msra.mxu0 %v1011
  %1275 = vmatmul.bf16.gmra.mxu0 %v486
  %v1276 = vpop.f32.mrf.mxu0
  %v1277 = vadd.f32 %v619, %v1276
  %v1278 = vpop.f32.mrf.mxu0
  %v1279 = vadd.f32 %v619, %v1278
  %1280 = vdwg.mxu0
  %1281 = vmatpush.bf16.msra.mxu0 %v1071
  %1282 = vmatpush.bf16.msra.mxu0 %v1067
  %1283 = vmatpush.bf16.msra.mxu0 %v1063
  %1284 = vmatpush.bf16.msra.mxu0 %v1059
  %1285 = vmatpush.bf16.msra.mxu0 %v1055
  %1286 = vmatpush.bf16.msra.mxu0 %v1051
  %1287 = vmatpush.bf16.msra.mxu0 %v1047
  %1288 = vmatpush.bf16.msra.mxu0 %v1043
  %1289 = vmatmul.bf16.gmra.mxu0 %v487
  %v1290 = vpop.f32.mrf.mxu0
  %v1291 = vadd.f32 %v1277, %v1290
  %v1292 = vpop.f32.mrf.mxu0
  %v1293 = vadd.f32 %v1279, %v1292
  %1294 = vdwg.mxu0
  %1295 = vmatpush.bf16.msra.mxu0 %v1103
  %1296 = vmatpush.bf16.msra.mxu0 %v1099
  %1297 = vmatpush.bf16.msra.mxu0 %v1095
  %1298 = vmatpush.bf16.msra.mxu0 %v1091
  %1299 = vmatpush.bf16.msra.mxu0 %v1087
  %1300 = vmatpush.bf16.msra.mxu0 %v1083
  %1301 = vmatpush.bf16.msra.mxu0 %v1079
  %1302 = vmatpush.bf16.msra.mxu0 %v1075
  %1303 = vmatmul.bf16.gmra.mxu0 %v488
  %v1304 = vpop.f32.mrf.mxu0
  %v1305 = vadd.f32 %v1291, %v1304
  %v1306 = vpop.f32.mrf.mxu0
  %v1307 = vadd.f32 %v1293, %v1306
  %1308 = vdwg.mxu0
  %1309 = vmatpush.bf16.msra.mxu0 %v1135
  %1310 = vmatpush.bf16.msra.mxu0 %v1131
  %1311 = vmatpush.bf16.msra.mxu0 %v1127
  %1312 = vmatpush.bf16.msra.mxu0 %v1123
  %1313 = vmatpush.bf16.msra.mxu0 %v1119
  %1314 = vmatpush.bf16.msra.mxu0 %v1115
  %1315 = vmatpush.bf16.msra.mxu0 %v1111
  %1316 = vmatpush.bf16.msra.mxu0 %v1107
  %1317 = vmatmul.bf16.gmra.mxu0 %v489
  %v1318 = vpop.f32.mrf.mxu0
  %v1319 = vadd.f32 %v1305, %v1318
  %v1320 = vpop.f32.mrf.mxu0
  %v1321 = vadd.f32 %v1307, %v1320
  %1322 = vdwg.mxu0
  %1323 = vmatpush.bf16.msra.mxu0 %v1040
  %1324 = vmatpush.bf16.msra.mxu0 %v1036
  %1325 = vmatpush.bf16.msra.mxu0 %v1032
  %1326 = vmatpush.bf16.msra.mxu0 %v1028
  %1327 = vmatpush.bf16.msra.mxu0 %v1024
  %1328 = vmatpush.bf16.msra.mxu0 %v1020
  %1329 = vmatpush.bf16.msra.mxu0 %v1016
  %1330 = vmatpush.bf16.msra.mxu0 %v1012
  %1331 = vmatmul.bf16.gmra.mxu0 %v486
  %v1332 = vpop.f32.mrf.mxu0
  %v1333 = vadd.f32 %v620, %v1332
  %v1334 = vpop.f32.mrf.mxu0
  %v1335 = vadd.f32 %v620, %v1334
  %1336 = vdwg.mxu0
  %1337 = vmatpush.bf16.msra.mxu0 %v1072
  %1338 = vmatpush.bf16.msra.mxu0 %v1068
  %1339 = vmatpush.bf16.msra.mxu0 %v1064
  %1340 = vmatpush.bf16.msra.mxu0 %v1060
  %1341 = vmatpush.bf16.msra.mxu0 %v1056
  %1342 = vmatpush.bf16.msra.mxu0 %v1052
  %1343 = vmatpush.bf16.msra.mxu0 %v1048
  %1344 = vmatpush.bf16.msra.mxu0 %v1044
  %1345 = vmatmul.bf16.gmra.mxu0 %v487
  %v1346 = vpop.f32.mrf.mxu0
  %v1347 = vadd.f32 %v1333, %v1346
  %v1348 = vpop.f32.mrf.mxu0
  %v1349 = vadd.f32 %v1335, %v1348
  %1350 = vdwg.mxu0
  %1351 = vmatpush.bf16.msra.mxu0 %v1104
  %1352 = vmatpush.bf16.msra.mxu0 %v1100
  %1353 = vmatpush.bf16.msra.mxu0 %v1096
  %1354 = vmatpush.bf16.msra.mxu0 %v1092
  %1355 = vmatpush.bf16.msra.mxu0 %v1088
  %1356 = vmatpush.bf16.msra.mxu0 %v1084
  %1357 = vmatpush.bf16.msra.mxu0 %v1080
  %1358 = vmatpush.bf16.msra.mxu0 %v1076
  %1359 = vmatmul.bf16.gmra.mxu0 %v488
  %v1360 = vpop.f32.mrf.mxu0
  %v1361 = vadd.f32 %v1347, %v1360
  %v1362 = vpop.f32.mrf.mxu0
  %v1363 = vadd.f32 %v1349, %v1362
  %1364 = vdwg.mxu0
  %1365 = vmatpush.bf16.msra.mxu0 %v1136
  %1366 = vmatpush.bf16.msra.mxu0 %v1132
  %1367 = vmatpush.bf16.msra.mxu0 %v1128
  %1368 = vmatpush.bf16.msra.mxu0 %v1124
  %1369 = vmatpush.bf16.msra.mxu0 %v1120
  %1370 = vmatpush.bf16.msra.mxu0 %v1116
  %1371 = vmatpush.bf16.msra.mxu0 %v1112
  %1372 = vmatpush.bf16.msra.mxu0 %v1108
  %1373 = vmatmul.bf16.gmra.mxu0 %v489
  %v1374 = vpop.f32.mrf.mxu0
  %v1375 = vadd.f32 %v1361, %v1374
  %v1376 = vpop.f32.mrf.mxu0
  %v1377 = vadd.f32 %v1363, %v1376
  %1378 = vdwg.mxu0
  %1379 = vmatpush.bf16.msra.mxu0 %v1041
  %1380 = vmatpush.bf16.msra.mxu0 %v1037
  %1381 = vmatpush.bf16.msra.mxu0 %v1033
  %1382 = vmatpush.bf16.msra.mxu0 %v1029
  %1383 = vmatpush.bf16.msra.mxu0 %v1025
  %1384 = vmatpush.bf16.msra.mxu0 %v1021
  %1385 = vmatpush.bf16.msra.mxu0 %v1017
  %1386 = vmatpush.bf16.msra.mxu0 %v1013
  %1387 = vmatmul.bf16.gmra.mxu0 %v486
  %v1388 = vpop.f32.mrf.mxu0
  %v1389 = vadd.f32 %v621, %v1388
  %v1390 = vpop.f32.mrf.mxu0
  %v1391 = vadd.f32 %v621, %v1390
  %1392 = vdwg.mxu0
  %1393 = vmatpush.bf16.msra.mxu0 %v1073
  %1394 = vmatpush.bf16.msra.mxu0 %v1069
  %1395 = vmatpush.bf16.msra.mxu0 %v1065
  %1396 = vmatpush.bf16.msra.mxu0 %v1061
  %1397 = vmatpush.bf16.msra.mxu0 %v1057
  %1398 = vmatpush.bf16.msra.mxu0 %v1053
  %1399 = vmatpush.bf16.msra.mxu0 %v1049
  %1400 = vmatpush.bf16.msra.mxu0 %v1045
  %1401 = vmatmul.bf16.gmra.mxu0 %v487
  %v1402 = vpop.f32.mrf.mxu0
  %v1403 = vadd.f32 %v1389, %v1402
  %v1404 = vpop.f32.mrf.mxu0
  %v1405 = vadd.f32 %v1391, %v1404
  %1406 = vdwg.mxu0
  %1407 = vmatpush.bf16.msra.mxu0 %v1105
  %1408 = vmatpush.bf16.msra.mxu0 %v1101
  %1409 = vmatpush.bf16.msra.mxu0 %v1097
  %1410 = vmatpush.bf16.msra.mxu0 %v1093
  %1411 = vmatpush.bf16.msra.mxu0 %v1089
  %1412 = vmatpush.bf16.msra.mxu0 %v1085
  %1413 = vmatpush.bf16.msra.mxu0 %v1081
  %1414 = vmatpush.bf16.msra.mxu0 %v1077
  %1415 = vmatmul.bf16.gmra.mxu0 %v488
  %v1416 = vpop.f32.mrf.mxu0
  %v1417 = vadd.f32 %v1403, %v1416
  %v1418 = vpop.f32.mrf.mxu0
  %v1419 = vadd.f32 %v1405, %v1418
  %1420 = vdwg.mxu0
  %1421 = vmatpush.bf16.msra.mxu0 %v1137
  %1422 = vmatpush.bf16.msra.mxu0 %v1133
  %1423 = vmatpush.bf16.msra.mxu0 %v1129
  %1424 = vmatpush.bf16.msra.mxu0 %v1125
  %1425 = vmatpush.bf16.msra.mxu0 %v1121
  %1426 = vmatpush.bf16.msra.mxu0 %v1117
  %1427 = vmatpush.bf16.msra.mxu0 %v1113
  %1428 = vmatpush.bf16.msra.mxu0 %v1109
  %1429 = vmatmul.bf16.gmra.mxu0 %v489
  %v1430 = vpop.f32.mrf.mxu0
  %v1431 = vadd.f32 %v1417, %v1430
  %v1432 = vpop.f32.mrf.mxu0
  %v1433 = vadd.f32 %v1419, %v1432
  %1434 = vdwg.mxu0
  %1435 = vmatpush.bf16.msra.mxu0 %v1042
  %1436 = vmatpush.bf16.msra.mxu0 %v1038
  %1437 = vmatpush.bf16.msra.mxu0 %v1034
  %1438 = vmatpush.bf16.msra.mxu0 %v1030
  %1439 = vmatpush.bf16.msra.mxu0 %v1026
  %1440 = vmatpush.bf16.msra.mxu0 %v1022
  %1441 = vmatpush.bf16.msra.mxu0 %v1018
  %1442 = vmatpush.bf16.msra.mxu0 %v1014
  %1443 = vmatmul.bf16.gmra.mxu0 %v486
  %v1444 = vpop.f32.mrf.mxu0
  %v1445 = vadd.f32 %v622, %v1444
  %v1446 = vpop.f32.mrf.mxu0
  %v1447 = vadd.f32 %v622, %v1446
  %1448 = vdwg.mxu0
  %1449 = vmatpush.bf16.msra.mxu0 %v1074
  %1450 = vmatpush.bf16.msra.mxu0 %v1070
  %1451 = vmatpush.bf16.msra.mxu0 %v1066
  %1452 = vmatpush.bf16.msra.mxu0 %v1062
  %1453 = vmatpush.bf16.msra.mxu0 %v1058
  %1454 = vmatpush.bf16.msra.mxu0 %v1054
  %1455 = vmatpush.bf16.msra.mxu0 %v1050
  %1456 = vmatpush.bf16.msra.mxu0 %v1046
  %1457 = vmatmul.bf16.gmra.mxu0 %v487
  %v1458 = vpop.f32.mrf.mxu0
  %v1459 = vadd.f32 %v1445, %v1458
  %v1460 = vpop.f32.mrf.mxu0
  %v1461 = vadd.f32 %v1447, %v1460
  %1462 = vdwg.mxu0
  %1463 = vmatpush.bf16.msra.mxu0 %v1106
  %1464 = vmatpush.bf16.msra.mxu0 %v1102
  %1465 = vmatpush.bf16.msra.mxu0 %v1098
  %1466 = vmatpush.bf16.msra.mxu0 %v1094
  %1467 = vmatpush.bf16.msra.mxu0 %v1090
  %1468 = vmatpush.bf16.msra.mxu0 %v1086
  %1469 = vmatpush.bf16.msra.mxu0 %v1082
  %1470 = vmatpush.bf16.msra.mxu0 %v1078
  %1471 = vmatmul.bf16.gmra.mxu0 %v488
  %v1472 = vpop.f32.mrf.mxu0
  %v1473 = vadd.f32 %v1459, %v1472
  %v1474 = vpop.f32.mrf.mxu0
  %v1475 = vadd.f32 %v1461, %v1474
  %1476 = vdwg.mxu0
  %1477 = vmatpush.bf16.msra.mxu0 %v1138
  %1478 = vmatpush.bf16.msra.mxu0 %v1134
  %1479 = vmatpush.bf16.msra.mxu0 %v1130
  %1480 = vmatpush.bf16.msra.mxu0 %v1126
  %1481 = vmatpush.bf16.msra.mxu0 %v1122
  %1482 = vmatpush.bf16.msra.mxu0 %v1118
  %1483 = vmatpush.bf16.msra.mxu0 %v1114
  %1484 = vmatpush.bf16.msra.mxu0 %v1110
  %1485 = vmatmul.bf16.gmra.mxu0 %v489
  %v1486 = vpop.f32.mrf.mxu0
  %v1487 = vadd.f32 %v1473, %v1486
  %v1488 = vpop.f32.mrf.mxu0
  %v1489 = vadd.f32 %v1475, %v1488
  %1490 = vdwg.mxu0
  %vm1491 = vcmp.gt.f32.partialorder %v1319, 0.0
  %vm1492 = vcmp.gt.f32.partialorder %v1375, 0.0
  %vm1493 = vcmp.gt.f32.partialorder %v1431, 0.0
  %vm1494 = vcmp.gt.f32.partialorder %v1487, 0.0
  %vm1495 = vcmp.gt.f32.partialorder %v1321, 0.0
  %vm1496 = vcmp.gt.f32.partialorder %v1377, 0.0
  %vm1497 = vcmp.gt.f32.partialorder %v1433, 0.0
  %vm1498 = vcmp.gt.f32.partialorder %v1489, 0.0
  %v1499 = vmul.f32 %v1319, 0.2
  %v1500 = vmul.f32 %v1375, 0.2
  %v1501 = vmul.f32 %v1431, 0.2
  %v1502 = vmul.f32 %v1487, 0.2
  %v1503 = vmul.f32 %v1321, 0.2
  %v1504 = vmul.f32 %v1377, 0.2
  %v1505 = vmul.f32 %v1433, 0.2
  %v1506 = vmul.f32 %v1489, 0.2
  %v1507 = vsel %vm1491, %v1319, %v1499
  %v1508 = vsel %vm1492, %v1375, %v1500
  %v1509 = vsel %vm1493, %v1431, %v1501
  %v1510 = vsel %vm1494, %v1487, %v1502
  %v1511 = vsel %vm1495, %v1321, %v1503
  %v1512 = vsel %vm1496, %v1377, %v1504
  %v1513 = vsel %vm1497, %v1433, %v1505
  %v1514 = vsel %vm1498, %v1489, %v1506
  %v1515 = vpack.c.bf16 %v1511, %v1507
  %v1516 = vpack.c.bf16 %v1512, %v1508
  %v1517 = vpack.c.bf16 %v1513, %v1509
  %v1518 = vpack.c.bf16 %v1514, %v1510
  %v1519 = vld [vmem:[%s5] sm:$0xff]
  %v1520 = vld [vmem:[%s5 + $0x8] sm:$0xff]
  %v1521 = vld [vmem:[%s5 + $0x10] sm:$0xff]
  %v1522 = vld [vmem:[%s5 + $0x18] sm:$0xff]
  %v1523 = vld [vmem:[%s5 + $0x20] sm:$0xff]
  %v1524 = vld [vmem:[%s5 + $0x28] sm:$0xff]
  %v1525 = vld [vmem:[%s5 + $0x30] sm:$0xff]
  %v1526 = vld [vmem:[%s5 + $0x38] sm:$0xff]
  %v1527 = vld [vmem:[%s5 + $0x40] sm:$0xff]
  %v1528 = vld [vmem:[%s5 + $0x48] sm:$0xff]
  %v1529 = vld [vmem:[%s5 + $0x50] sm:$0xff]
  %v1530 = vld [vmem:[%s5 + $0x58] sm:$0xff]
  %v1531 = vld [vmem:[%s5 + $0x60] sm:$0xff]
  %v1532 = vld [vmem:[%s5 + $0x68] sm:$0xff]
  %v1533 = vld [vmem:[%s5 + $0x70] sm:$0xff]
  %v1534 = vld [vmem:[%s5 + $0x78] sm:$0xff]
  %v1535 = vld [vmem:[%s5 + $0x80] sm:$0xff]
  %v1536 = vld [vmem:[%s5 + $0x88] sm:$0xff]
  %v1537 = vld [vmem:[%s5 + $0x90] sm:$0xff]
  %v1538 = vld [vmem:[%s5 + $0x98] sm:$0xff]
  %v1539 = vld [vmem:[%s5 + $0xa0] sm:$0xff]
  %v1540 = vld [vmem:[%s5 + $0xa8] sm:$0xff]
  %v1541 = vld [vmem:[%s5 + $0xb0] sm:$0xff]
  %v1542 = vld [vmem:[%s5 + $0xb8] sm:$0xff]
  %v1543 = vld [vmem:[%s5 + $0xc0] sm:$0xff]
  %v1544 = vld [vmem:[%s5 + $0xc8] sm:$0xff]
  %v1545 = vld [vmem:[%s5 + $0xd0] sm:$0xff]
  %v1546 = vld [vmem:[%s5 + $0xd8] sm:$0xff]
  %v1547 = vld [vmem:[%s5 + $0xe0] sm:$0xff]
  %v1548 = vld [vmem:[%s5 + $0xe8] sm:$0xff]
  %v1549 = vld [vmem:[%s5 + $0xf0] sm:$0xff]
  %v1550 = vld [vmem:[%s5 + $0xf8] sm:$0xff]
  %v1551 = vld [vmem:[%s5 + $0x100] sm:$0xff]
  %v1552 = vld [vmem:[%s5 + $0x108] sm:$0xff]
  %v1553 = vld [vmem:[%s5 + $0x110] sm:$0xff]
  %v1554 = vld [vmem:[%s5 + $0x118] sm:$0xff]
  %v1555 = vld [vmem:[%s5 + $0x120] sm:$0xff]
  %v1556 = vld [vmem:[%s5 + $0x128] sm:$0xff]
  %v1557 = vld [vmem:[%s5 + $0x130] sm:$0xff]
  %v1558 = vld [vmem:[%s5 + $0x138] sm:$0xff]
  %v1559 = vld [vmem:[%s5 + $0x140] sm:$0xff]
  %v1560 = vld [vmem:[%s5 + $0x148] sm:$0xff]
  %v1561 = vld [vmem:[%s5 + $0x150] sm:$0xff]
  %v1562 = vld [vmem:[%s5 + $0x158] sm:$0xff]
  %v1563 = vld [vmem:[%s5 + $0x160] sm:$0xff]
  %v1564 = vld [vmem:[%s5 + $0x168] sm:$0xff]
  %v1565 = vld [vmem:[%s5 + $0x170] sm:$0xff]
  %v1566 = vld [vmem:[%s5 + $0x178] sm:$0xff]
  %v1567 = vld [vmem:[%s5 + $0x180] sm:$0xff]
  %v1568 = vld [vmem:[%s5 + $0x188] sm:$0xff]
  %v1569 = vld [vmem:[%s5 + $0x190] sm:$0xff]
  %v1570 = vld [vmem:[%s5 + $0x198] sm:$0xff]
  %v1571 = vld [vmem:[%s5 + $0x1a0] sm:$0xff]
  %v1572 = vld [vmem:[%s5 + $0x1a8] sm:$0xff]
  %v1573 = vld [vmem:[%s5 + $0x1b0] sm:$0xff]
  %v1574 = vld [vmem:[%s5 + $0x1b8] sm:$0xff]
  %v1575 = vld [vmem:[%s5 + $0x1c0] sm:$0xff]
  %v1576 = vld [vmem:[%s5 + $0x1c8] sm:$0xff]
  %v1577 = vld [vmem:[%s5 + $0x1d0] sm:$0xff]
  %v1578 = vld [vmem:[%s5 + $0x1d8] sm:$0xff]
  %v1579 = vld [vmem:[%s5 + $0x1e0] sm:$0xff]
  %v1580 = vld [vmem:[%s5 + $0x1e8] sm:$0xff]
  %v1581 = vld [vmem:[%s5 + $0x1f0] sm:$0xff]
  %v1582 = vld [vmem:[%s5 + $0x1f8] sm:$0xff]
  %v1583 = vld [vmem:[%s5 + $0x200] sm:$0xff]
  %v1584 = vld [vmem:[%s5 + $0x208] sm:$0xff]
  %v1585 = vld [vmem:[%s5 + $0x210] sm:$0xff]
  %v1586 = vld [vmem:[%s5 + $0x218] sm:$0xff]
  %v1587 = vld [vmem:[%s5 + $0x220] sm:$0xff]
  %v1588 = vld [vmem:[%s5 + $0x228] sm:$0xff]
  %v1589 = vld [vmem:[%s5 + $0x230] sm:$0xff]
  %v1590 = vld [vmem:[%s5 + $0x238] sm:$0xff]
  %v1591 = vld [vmem:[%s5 + $0x240] sm:$0xff]
  %v1592 = vld [vmem:[%s5 + $0x248] sm:$0xff]
  %v1593 = vld [vmem:[%s5 + $0x250] sm:$0xff]
  %v1594 = vld [vmem:[%s5 + $0x258] sm:$0xff]
  %v1595 = vld [vmem:[%s5 + $0x260] sm:$0xff]
  %v1596 = vld [vmem:[%s5 + $0x268] sm:$0xff]
  %v1597 = vld [vmem:[%s5 + $0x270] sm:$0xff]
  %v1598 = vld [vmem:[%s5 + $0x278] sm:$0xff]
  %v1599 = vld [vmem:[%s5 + $0x280] sm:$0xff]
  %v1600 = vld [vmem:[%s5 + $0x288] sm:$0xff]
  %v1601 = vld [vmem:[%s5 + $0x290] sm:$0xff]
  %v1602 = vld [vmem:[%s5 + $0x298] sm:$0xff]
  %v1603 = vld [vmem:[%s5 + $0x2a0] sm:$0xff]
  %v1604 = vld [vmem:[%s5 + $0x2a8] sm:$0xff]
  %v1605 = vld [vmem:[%s5 + $0x2b0] sm:$0xff]
  %v1606 = vld [vmem:[%s5 + $0x2b8] sm:$0xff]
  %v1607 = vld [vmem:[%s5 + $0x2c0] sm:$0xff]
  %v1608 = vld [vmem:[%s5 + $0x2c8] sm:$0xff]
  %v1609 = vld [vmem:[%s5 + $0x2d0] sm:$0xff]
  %v1610 = vld [vmem:[%s5 + $0x2d8] sm:$0xff]
  %v1611 = vld [vmem:[%s5 + $0x2e0] sm:$0xff]
  %v1612 = vld [vmem:[%s5 + $0x2e8] sm:$0xff]
  %v1613 = vld [vmem:[%s5 + $0x2f0] sm:$0xff]
  %v1614 = vld [vmem:[%s5 + $0x2f8] sm:$0xff]
  %v1615 = vld [vmem:[%s5 + $0x300] sm:$0xff]
  %v1616 = vld [vmem:[%s5 + $0x308] sm:$0xff]
  %v1617 = vld [vmem:[%s5 + $0x310] sm:$0xff]
  %v1618 = vld [vmem:[%s5 + $0x318] sm:$0xff]
  %v1619 = vld [vmem:[%s5 + $0x320] sm:$0xff]
  %v1620 = vld [vmem:[%s5 + $0x328] sm:$0xff]
  %v1621 = vld [vmem:[%s5 + $0x330] sm:$0xff]
  %v1622 = vld [vmem:[%s5 + $0x338] sm:$0xff]
  %v1623 = vld [vmem:[%s5 + $0x340] sm:$0xff]
  %v1624 = vld [vmem:[%s5 + $0x348] sm:$0xff]
  %v1625 = vld [vmem:[%s5 + $0x350] sm:$0xff]
  %v1626 = vld [vmem:[%s5 + $0x358] sm:$0xff]
  %v1627 = vld [vmem:[%s5 + $0x360] sm:$0xff]
  %v1628 = vld [vmem:[%s5 + $0x368] sm:$0xff]
  %v1629 = vld [vmem:[%s5 + $0x370] sm:$0xff]
  %v1630 = vld [vmem:[%s5 + $0x378] sm:$0xff]
  %v1631 = vld [vmem:[%s5 + $0x380] sm:$0xff]
  %v1632 = vld [vmem:[%s5 + $0x388] sm:$0xff]
  %v1633 = vld [vmem:[%s5 + $0x390] sm:$0xff]
  %v1634 = vld [vmem:[%s5 + $0x398] sm:$0xff]
  %v1635 = vld [vmem:[%s5 + $0x3a0] sm:$0xff]
  %v1636 = vld [vmem:[%s5 + $0x3a8] sm:$0xff]
  %v1637 = vld [vmem:[%s5 + $0x3b0] sm:$0xff]
  %v1638 = vld [vmem:[%s5 + $0x3b8] sm:$0xff]
  %v1639 = vld [vmem:[%s5 + $0x3c0] sm:$0xff]
  %v1640 = vld [vmem:[%s5 + $0x3c8] sm:$0xff]
  %v1641 = vld [vmem:[%s5 + $0x3d0] sm:$0xff]
  %v1642 = vld [vmem:[%s5 + $0x3d8] sm:$0xff]
  %v1643 = vld [vmem:[%s5 + $0x3e0] sm:$0xff]
  %v1644 = vld [vmem:[%s5 + $0x3e8] sm:$0xff]
  %v1645 = vld [vmem:[%s5 + $0x3f0] sm:$0xff]
  %v1646 = vld [vmem:[%s5 + $0x3f8] sm:$0xff]
  %v1648 = vperm.slane %v31, 0
  %v1649 = vperm.slane %v31, 1
  %v1650 = vperm.slane %v31, 2
  %v1651 = vperm.slane %v31, 3
  %v1784 = vunpack.c.l.b16 %v1519
  %v1785 = vunpack.c.h.b16 %v1519
  %v1786 = vunpack.c.l.b16 %v1520
  %v1787 = vunpack.c.h.b16 %v1520
  %v1788 = vunpack.c.l.b16 %v1521
  %v1789 = vunpack.c.h.b16 %v1521
  %v1790 = vunpack.c.l.b16 %v1522
  %v1791 = vunpack.c.h.b16 %v1522
  %v1792 = vunpack.c.l.b16 %v1523
  %v1793 = vunpack.c.h.b16 %v1523
  %v1794 = vunpack.c.l.b16 %v1524
  %v1795 = vunpack.c.h.b16 %v1524
  %v1796 = vunpack.c.l.b16 %v1525
  %v1797 = vunpack.c.h.b16 %v1525
  %v1798 = vunpack.c.l.b16 %v1526
  %v1799 = vunpack.c.h.b16 %v1526
  %v1800 = vunpack.c.l.b16 %v1527
  %v1801 = vunpack.c.h.b16 %v1527
  %v1802 = vunpack.c.l.b16 %v1528
  %v1803 = vunpack.c.h.b16 %v1528
  %v1804 = vunpack.c.l.b16 %v1529
  %v1805 = vunpack.c.h.b16 %v1529
  %v1806 = vunpack.c.l.b16 %v1530
  %v1807 = vunpack.c.h.b16 %v1530
  %v1808 = vunpack.c.l.b16 %v1531
  %v1809 = vunpack.c.h.b16 %v1531
  %v1810 = vunpack.c.l.b16 %v1532
  %v1811 = vunpack.c.h.b16 %v1532
  %v1812 = vunpack.c.l.b16 %v1533
  %v1813 = vunpack.c.h.b16 %v1533
  %v1814 = vunpack.c.l.b16 %v1534
  %v1815 = vunpack.c.h.b16 %v1534
  %v1816 = vunpack.c.l.b16 %v1535
  %v1817 = vunpack.c.h.b16 %v1535
  %v1818 = vunpack.c.l.b16 %v1536
  %v1819 = vunpack.c.h.b16 %v1536
  %v1820 = vunpack.c.l.b16 %v1537
  %v1821 = vunpack.c.h.b16 %v1537
  %v1822 = vunpack.c.l.b16 %v1538
  %v1823 = vunpack.c.h.b16 %v1538
  %v1824 = vunpack.c.l.b16 %v1539
  %v1825 = vunpack.c.h.b16 %v1539
  %v1826 = vunpack.c.l.b16 %v1540
  %v1827 = vunpack.c.h.b16 %v1540
  %v1828 = vunpack.c.l.b16 %v1541
  %v1829 = vunpack.c.h.b16 %v1541
  %v1830 = vunpack.c.l.b16 %v1542
  %v1831 = vunpack.c.h.b16 %v1542
  %v1832 = vunpack.c.l.b16 %v1543
  %v1833 = vunpack.c.h.b16 %v1543
  %v1834 = vunpack.c.l.b16 %v1544
  %v1835 = vunpack.c.h.b16 %v1544
  %v1836 = vunpack.c.l.b16 %v1545
  %v1837 = vunpack.c.h.b16 %v1545
  %v1838 = vunpack.c.l.b16 %v1546
  %v1839 = vunpack.c.h.b16 %v1546
  %v1840 = vunpack.c.l.b16 %v1547
  %v1841 = vunpack.c.h.b16 %v1547
  %v1842 = vunpack.c.l.b16 %v1548
  %v1843 = vunpack.c.h.b16 %v1548
  %v1844 = vunpack.c.l.b16 %v1549
  %v1845 = vunpack.c.h.b16 %v1549
  %v1846 = vunpack.c.l.b16 %v1550
  %v1847 = vunpack.c.h.b16 %v1550
  %v1848 = vunpack.c.l.b16 %v1551
  %v1849 = vunpack.c.h.b16 %v1551
  %v1850 = vunpack.c.l.b16 %v1552
  %v1851 = vunpack.c.h.b16 %v1552
  %v1852 = vunpack.c.l.b16 %v1553
  %v1853 = vunpack.c.h.b16 %v1553
  %v1854 = vunpack.c.l.b16 %v1554
  %v1855 = vunpack.c.h.b16 %v1554
  %v1856 = vunpack.c.l.b16 %v1555
  %v1857 = vunpack.c.h.b16 %v1555
  %v1858 = vunpack.c.l.b16 %v1556
  %v1859 = vunpack.c.h.b16 %v1556
  %v1860 = vunpack.c.l.b16 %v1557
  %v1861 = vunpack.c.h.b16 %v1557
  %v1862 = vunpack.c.l.b16 %v1558
  %v1863 = vunpack.c.h.b16 %v1558
  %v1864 = vunpack.c.l.b16 %v1559
  %v1865 = vunpack.c.h.b16 %v1559
  %v1866 = vunpack.c.l.b16 %v1560
  %v1867 = vunpack.c.h.b16 %v1560
  %v1868 = vunpack.c.l.b16 %v1561
  %v1869 = vunpack.c.h.b16 %v1561
  %v1870 = vunpack.c.l.b16 %v1562
  %v1871 = vunpack.c.h.b16 %v1562
  %v1872 = vunpack.c.l.b16 %v1563
  %v1873 = vunpack.c.h.b16 %v1563
  %v1874 = vunpack.c.l.b16 %v1564
  %v1875 = vunpack.c.h.b16 %v1564
  %v1876 = vunpack.c.l.b16 %v1565
  %v1877 = vunpack.c.h.b16 %v1565
  %v1878 = vunpack.c.l.b16 %v1566
  %v1879 = vunpack.c.h.b16 %v1566
  %v1880 = vunpack.c.l.b16 %v1567
  %v1881 = vunpack.c.h.b16 %v1567
  %v1882 = vunpack.c.l.b16 %v1568
  %v1883 = vunpack.c.h.b16 %v1568
  %v1884 = vunpack.c.l.b16 %v1569
  %v1885 = vunpack.c.h.b16 %v1569
  %v1886 = vunpack.c.l.b16 %v1570
  %v1887 = vunpack.c.h.b16 %v1570
  %v1888 = vunpack.c.l.b16 %v1571
  %v1889 = vunpack.c.h.b16 %v1571
  %v1890 = vunpack.c.l.b16 %v1572
  %v1891 = vunpack.c.h.b16 %v1572
  %v1892 = vunpack.c.l.b16 %v1573
  %v1893 = vunpack.c.h.b16 %v1573
  %v1894 = vunpack.c.l.b16 %v1574
  %v1895 = vunpack.c.h.b16 %v1574
  %v1896 = vunpack.c.l.b16 %v1575
  %v1897 = vunpack.c.h.b16 %v1575
  %v1898 = vunpack.c.l.b16 %v1576
  %v1899 = vunpack.c.h.b16 %v1576
  %v1900 = vunpack.c.l.b16 %v1577
  %v1901 = vunpack.c.h.b16 %v1577
  %v1902 = vunpack.c.l.b16 %v1578
  %v1903 = vunpack.c.h.b16 %v1578
  %v1904 = vunpack.c.l.b16 %v1579
  %v1905 = vunpack.c.h.b16 %v1579
  %v1906 = vunpack.c.l.b16 %v1580
  %v1907 = vunpack.c.h.b16 %v1580
  %v1908 = vunpack.c.l.b16 %v1581
  %v1909 = vunpack.c.h.b16 %v1581
  %v1910 = vunpack.c.l.b16 %v1582
  %v1911 = vunpack.c.h.b16 %v1582
  %v1912 = vunpack.c.l.b16 %v1583
  %v1913 = vunpack.c.h.b16 %v1583
  %v1914 = vunpack.c.l.b16 %v1584
  %v1915 = vunpack.c.h.b16 %v1584
  %v1916 = vunpack.c.l.b16 %v1585
  %v1917 = vunpack.c.h.b16 %v1585
  %v1918 = vunpack.c.l.b16 %v1586
  %v1919 = vunpack.c.h.b16 %v1586
  %v1920 = vunpack.c.l.b16 %v1587
  %v1921 = vunpack.c.h.b16 %v1587
  %v1922 = vunpack.c.l.b16 %v1588
  %v1923 = vunpack.c.h.b16 %v1588
  %v1924 = vunpack.c.l.b16 %v1589
  %v1925 = vunpack.c.h.b16 %v1589
  %v1926 = vunpack.c.l.b16 %v1590
  %v1927 = vunpack.c.h.b16 %v1590
  %v1928 = vunpack.c.l.b16 %v1591
  %v1929 = vunpack.c.h.b16 %v1591
  %v1930 = vunpack.c.l.b16 %v1592
  %v1931 = vunpack.c.h.b16 %v1592
  %v1932 = vunpack.c.l.b16 %v1593
  %v1933 = vunpack.c.h.b16 %v1593
  %v1934 = vunpack.c.l.b16 %v1594
  %v1935 = vunpack.c.h.b16 %v1594
  %v1936 = vunpack.c.l.b16 %v1595
  %v1937 = vunpack.c.h.b16 %v1595
  %v1938 = vunpack.c.l.b16 %v1596
  %v1939 = vunpack.c.h.b16 %v1596
  %v1940 = vunpack.c.l.b16 %v1597
  %v1941 = vunpack.c.h.b16 %v1597
  %v1942 = vunpack.c.l.b16 %v1598
  %v1943 = vunpack.c.h.b16 %v1598
  %v1944 = vunpack.c.l.b16 %v1599
  %v1945 = vunpack.c.h.b16 %v1599
  %v1946 = vunpack.c.l.b16 %v1600
  %v1947 = vunpack.c.h.b16 %v1600
  %v1948 = vunpack.c.l.b16 %v1601
  %v1949 = vunpack.c.h.b16 %v1601
  %v1950 = vunpack.c.l.b16 %v1602
  %v1951 = vunpack.c.h.b16 %v1602
  %v1952 = vunpack.c.l.b16 %v1603
  %v1953 = vunpack.c.h.b16 %v1603
  %v1954 = vunpack.c.l.b16 %v1604
  %v1955 = vunpack.c.h.b16 %v1604
  %v1956 = vunpack.c.l.b16 %v1605
  %v1957 = vunpack.c.h.b16 %v1605
  %v1958 = vunpack.c.l.b16 %v1606
  %v1959 = vunpack.c.h.b16 %v1606
  %v1960 = vunpack.c.l.b16 %v1607
  %v1961 = vunpack.c.h.b16 %v1607
  %v1962 = vunpack.c.l.b16 %v1608
  %v1963 = vunpack.c.h.b16 %v1608
  %v1964 = vunpack.c.l.b16 %v1609
  %v1965 = vunpack.c.h.b16 %v1609
  %v1966 = vunpack.c.l.b16 %v1610
  %v1967 = vunpack.c.h.b16 %v1610
  %v1968 = vunpack.c.l.b16 %v1611
  %v1969 = vunpack.c.h.b16 %v1611
  %v1970 = vunpack.c.l.b16 %v1612
  %v1971 = vunpack.c.h.b16 %v1612
  %v1972 = vunpack.c.l.b16 %v1613
  %v1973 = vunpack.c.h.b16 %v1613
  %v1974 = vunpack.c.l.b16 %v1614
  %v1975 = vunpack.c.h.b16 %v1614
  %v1976 = vunpack.c.l.b16 %v1615
  %v1977 = vunpack.c.h.b16 %v1615
  %v1978 = vunpack.c.l.b16 %v1616
  %v1979 = vunpack.c.h.b16 %v1616
  %v1980 = vunpack.c.l.b16 %v1617
  %v1981 = vunpack.c.h.b16 %v1617
  %v1982 = vunpack.c.l.b16 %v1618
  %v1983 = vunpack.c.h.b16 %v1618
  %v1984 = vunpack.c.l.b16 %v1619
  %v1985 = vunpack.c.h.b16 %v1619
  %v1986 = vunpack.c.l.b16 %v1620
  %v1987 = vunpack.c.h.b16 %v1620
  %v1988 = vunpack.c.l.b16 %v1621
  %v1989 = vunpack.c.h.b16 %v1621
  %v1990 = vunpack.c.l.b16 %v1622
  %v1991 = vunpack.c.h.b16 %v1622
  %v1992 = vunpack.c.l.b16 %v1623
  %v1993 = vunpack.c.h.b16 %v1623
  %v1994 = vunpack.c.l.b16 %v1624
  %v1995 = vunpack.c.h.b16 %v1624
  %v1996 = vunpack.c.l.b16 %v1625
  %v1997 = vunpack.c.h.b16 %v1625
  %v1998 = vunpack.c.l.b16 %v1626
  %v1999 = vunpack.c.h.b16 %v1626
  %v2000 = vunpack.c.l.b16 %v1627
  %v2001 = vunpack.c.h.b16 %v1627
  %v2002 = vunpack.c.l.b16 %v1628
  %v2003 = vunpack.c.h.b16 %v1628
  %v2004 = vunpack.c.l.b16 %v1629
  %v2005 = vunpack.c.h.b16 %v1629
  %v2006 = vunpack.c.l.b16 %v1630
  %v2007 = vunpack.c.h.b16 %v1630
  %v2008 = vunpack.c.l.b16 %v1631
  %v2009 = vunpack.c.h.b16 %v1631
  %v2010 = vunpack.c.l.b16 %v1632
  %v2011 = vunpack.c.h.b16 %v1632
  %v2012 = vunpack.c.l.b16 %v1633
  %v2013 = vunpack.c.h.b16 %v1633
  %v2014 = vunpack.c.l.b16 %v1634
  %v2015 = vunpack.c.h.b16 %v1634
  %v2016 = vunpack.c.l.b16 %v1635
  %v2017 = vunpack.c.h.b16 %v1635
  %v2018 = vunpack.c.l.b16 %v1636
  %v2019 = vunpack.c.h.b16 %v1636
  %v2020 = vunpack.c.l.b16 %v1637
  %v2021 = vunpack.c.h.b16 %v1637
  %v2022 = vunpack.c.l.b16 %v1638
  %v2023 = vunpack.c.h.b16 %v1638
  %v2024 = vunpack.c.l.b16 %v1639
  %v2025 = vunpack.c.h.b16 %v1639
  %v2026 = vunpack.c.l.b16 %v1640
  %v2027 = vunpack.c.h.b16 %v1640
  %v2028 = vunpack.c.l.b16 %v1641
  %v2029 = vunpack.c.h.b16 %v1641
  %v2030 = vunpack.c.l.b16 %v1642
  %v2031 = vunpack.c.h.b16 %v1642
  %v2032 = vunpack.c.l.b16 %v1643
  %v2033 = vunpack.c.h.b16 %v1643
  %v2034 = vunpack.c.l.b16 %v1644
  %v2035 = vunpack.c.h.b16 %v1644
  %v2036 = vunpack.c.l.b16 %v1645
  %v2037 = vunpack.c.h.b16 %v1645
  %v2038 = vunpack.c.l.b16 %v1646
  %v2039 = vunpack.c.h.b16 %v1646
  %v2040 = vpack.c.b16 %v1788, %v1784
  %v2041 = vpack.c.b16 %v1789, %v1785
  %v2042 = vpack.c.b16 %v1790, %v1786
  %v2043 = vpack.c.b16 %v1791, %v1787
  %v2044 = vpack.c.b16 %v1796, %v1792
  %v2045 = vpack.c.b16 %v1797, %v1793
  %v2046 = vpack.c.b16 %v1798, %v1794
  %v2047 = vpack.c.b16 %v1799, %v1795
  %v2048 = vpack.c.b16 %v1804, %v1800
  %v2049 = vpack.c.b16 %v1805, %v1801
  %v2050 = vpack.c.b16 %v1806, %v1802
  %v2051 = vpack.c.b16 %v1807, %v1803
  %v2052 = vpack.c.b16 %v1812, %v1808
  %v2053 = vpack.c.b16 %v1813, %v1809
  %v2054 = vpack.c.b16 %v1814, %v1810
  %v2055 = vpack.c.b16 %v1815, %v1811
  %v2056 = vpack.c.b16 %v1820, %v1816
  %v2057 = vpack.c.b16 %v1821, %v1817
  %v2058 = vpack.c.b16 %v1822, %v1818
  %v2059 = vpack.c.b16 %v1823, %v1819
  %v2060 = vpack.c.b16 %v1828, %v1824
  %v2061 = vpack.c.b16 %v1829, %v1825
  %v2062 = vpack.c.b16 %v1830, %v1826
  %v2063 = vpack.c.b16 %v1831, %v1827
  %v2064 = vpack.c.b16 %v1836, %v1832
  %v2065 = vpack.c.b16 %v1837, %v1833
  %v2066 = vpack.c.b16 %v1838, %v1834
  %v2067 = vpack.c.b16 %v1839, %v1835
  %v2068 = vpack.c.b16 %v1844, %v1840
  %v2069 = vpack.c.b16 %v1845, %v1841
  %v2070 = vpack.c.b16 %v1846, %v1842
  %v2071 = vpack.c.b16 %v1847, %v1843
  %v2072 = vpack.c.b16 %v1852, %v1848
  %v2073 = vpack.c.b16 %v1853, %v1849
  %v2074 = vpack.c.b16 %v1854, %v1850
  %v2075 = vpack.c.b16 %v1855, %v1851
  %v2076 = vpack.c.b16 %v1860, %v1856
  %v2077 = vpack.c.b16 %v1861, %v1857
  %v2078 = vpack.c.b16 %v1862, %v1858
  %v2079 = vpack.c.b16 %v1863, %v1859
  %v2080 = vpack.c.b16 %v1868, %v1864
  %v2081 = vpack.c.b16 %v1869, %v1865
  %v2082 = vpack.c.b16 %v1870, %v1866
  %v2083 = vpack.c.b16 %v1871, %v1867
  %v2084 = vpack.c.b16 %v1876, %v1872
  %v2085 = vpack.c.b16 %v1877, %v1873
  %v2086 = vpack.c.b16 %v1878, %v1874
  %v2087 = vpack.c.b16 %v1879, %v1875
  %v2088 = vpack.c.b16 %v1884, %v1880
  %v2089 = vpack.c.b16 %v1885, %v1881
  %v2090 = vpack.c.b16 %v1886, %v1882
  %v2091 = vpack.c.b16 %v1887, %v1883
  %v2092 = vpack.c.b16 %v1892, %v1888
  %v2093 = vpack.c.b16 %v1893, %v1889
  %v2094 = vpack.c.b16 %v1894, %v1890
  %v2095 = vpack.c.b16 %v1895, %v1891
  %v2096 = vpack.c.b16 %v1900, %v1896
  %v2097 = vpack.c.b16 %v1901, %v1897
  %v2098 = vpack.c.b16 %v1902, %v1898
  %v2099 = vpack.c.b16 %v1903, %v1899
  %v2100 = vpack.c.b16 %v1908, %v1904
  %v2101 = vpack.c.b16 %v1909, %v1905
  %v2102 = vpack.c.b16 %v1910, %v1906
  %v2103 = vpack.c.b16 %v1911, %v1907
  %v2104 = vpack.c.b16 %v1916, %v1912
  %v2105 = vpack.c.b16 %v1917, %v1913
  %v2106 = vpack.c.b16 %v1918, %v1914
  %v2107 = vpack.c.b16 %v1919, %v1915
  %v2108 = vpack.c.b16 %v1924, %v1920
  %v2109 = vpack.c.b16 %v1925, %v1921
  %v2110 = vpack.c.b16 %v1926, %v1922
  %v2111 = vpack.c.b16 %v1927, %v1923
  %v2112 = vpack.c.b16 %v1932, %v1928
  %v2113 = vpack.c.b16 %v1933, %v1929
  %v2114 = vpack.c.b16 %v1934, %v1930
  %v2115 = vpack.c.b16 %v1935, %v1931
  %v2116 = vpack.c.b16 %v1940, %v1936
  %v2117 = vpack.c.b16 %v1941, %v1937
  %v2118 = vpack.c.b16 %v1942, %v1938
  %v2119 = vpack.c.b16 %v1943, %v1939
  %v2120 = vpack.c.b16 %v1948, %v1944
  %v2121 = vpack.c.b16 %v1949, %v1945
  %v2122 = vpack.c.b16 %v1950, %v1946
  %v2123 = vpack.c.b16 %v1951, %v1947
  %v2124 = vpack.c.b16 %v1956, %v1952
  %v2125 = vpack.c.b16 %v1957, %v1953
  %v2126 = vpack.c.b16 %v1958, %v1954
  %v2127 = vpack.c.b16 %v1959, %v1955
  %v2128 = vpack.c.b16 %v1964, %v1960
  %v2129 = vpack.c.b16 %v1965, %v1961
  %v2130 = vpack.c.b16 %v1966, %v1962
  %v2131 = vpack.c.b16 %v1967, %v1963
  %v2132 = vpack.c.b16 %v1972, %v1968
  %v2133 = vpack.c.b16 %v1973, %v1969
  %v2134 = vpack.c.b16 %v1974, %v1970
  %v2135 = vpack.c.b16 %v1975, %v1971
  %v2136 = vpack.c.b16 %v1980, %v1976
  %v2137 = vpack.c.b16 %v1981, %v1977
  %v2138 = vpack.c.b16 %v1982, %v1978
  %v2139 = vpack.c.b16 %v1983, %v1979
  %v2140 = vpack.c.b16 %v1988, %v1984
  %v2141 = vpack.c.b16 %v1989, %v1985
  %v2142 = vpack.c.b16 %v1990, %v1986
  %v2143 = vpack.c.b16 %v1991, %v1987
  %v2144 = vpack.c.b16 %v1996, %v1992
  %v2145 = vpack.c.b16 %v1997, %v1993
  %v2146 = vpack.c.b16 %v1998, %v1994
  %v2147 = vpack.c.b16 %v1999, %v1995
  %v2148 = vpack.c.b16 %v2004, %v2000
  %v2149 = vpack.c.b16 %v2005, %v2001
  %v2150 = vpack.c.b16 %v2006, %v2002
  %v2151 = vpack.c.b16 %v2007, %v2003
  %v2152 = vpack.c.b16 %v2012, %v2008
  %v2153 = vpack.c.b16 %v2013, %v2009
  %v2154 = vpack.c.b16 %v2014, %v2010
  %v2155 = vpack.c.b16 %v2015, %v2011
  %v2156 = vpack.c.b16 %v2020, %v2016
  %v2157 = vpack.c.b16 %v2021, %v2017
  %v2158 = vpack.c.b16 %v2022, %v2018
  %v2159 = vpack.c.b16 %v2023, %v2019
  %v2160 = vpack.c.b16 %v2028, %v2024
  %v2161 = vpack.c.b16 %v2029, %v2025
  %v2162 = vpack.c.b16 %v2030, %v2026
  %v2163 = vpack.c.b16 %v2031, %v2027
  %v2164 = vpack.c.b16 %v2036, %v2032
  %v2165 = vpack.c.b16 %v2037, %v2033
  %v2166 = vpack.c.b16 %v2038, %v2034
  %v2167 = vpack.c.b16 %v2039, %v2035
  %2296 = vmatpush.bf16.msra.mxu0 %v2068
  %2297 = vmatpush.bf16.msra.mxu0 %v2064
  %2298 = vmatpush.bf16.msra.mxu0 %v2060
  %2299 = vmatpush.bf16.msra.mxu0 %v2056
  %2300 = vmatpush.bf16.msra.mxu0 %v2052
  %2301 = vmatpush.bf16.msra.mxu0 %v2048
  %2302 = vmatpush.bf16.msra.mxu0 %v2044
  %2303 = vmatpush.bf16.msra.mxu0 %v2040
  %2304 = vmatmul.bf16.gmra.mxu0 %v1515
  %v2305 = vpop.f32.mrf.mxu0
  %v2306 = vadd.f32 %v1648, %v2305
  %v2307 = vpop.f32.mrf.mxu0
  %v2308 = vadd.f32 %v1648, %v2307
  %2309 = vdwg.mxu0
  %2310 = vmatpush.bf16.msra.mxu0 %v2100
  %2311 = vmatpush.bf16.msra.mxu0 %v2096
  %2312 = vmatpush.bf16.msra.mxu0 %v2092
  %2313 = vmatpush.bf16.msra.mxu0 %v2088
  %2314 = vmatpush.bf16.msra.mxu0 %v2084
  %2315 = vmatpush.bf16.msra.mxu0 %v2080
  %2316 = vmatpush.bf16.msra.mxu0 %v2076
  %2317 = vmatpush.bf16.msra.mxu0 %v2072
  %2318 = vmatmul.bf16.gmra.mxu0 %v1516
  %v2319 = vpop.f32.mrf.mxu0
  %v2320 = vadd.f32 %v2306, %v2319
  %v2321 = vpop.f32.mrf.mxu0
  %v2322 = vadd.f32 %v2308, %v2321
  %2323 = vdwg.mxu0
  %2324 = vmatpush.bf16.msra.mxu0 %v2132
  %2325 = vmatpush.bf16.msra.mxu0 %v2128
  %2326 = vmatpush.bf16.msra.mxu0 %v2124
  %2327 = vmatpush.bf16.msra.mxu0 %v2120
  %2328 = vmatpush.bf16.msra.mxu0 %v2116
  %2329 = vmatpush.bf16.msra.mxu0 %v2112
  %2330 = vmatpush.bf16.msra.mxu0 %v2108
  %2331 = vmatpush.bf16.msra.mxu0 %v2104
  %2332 = vmatmul.bf16.gmra.mxu0 %v1517
  %v2333 = vpop.f32.mrf.mxu0
  %v2334 = vadd.f32 %v2320, %v2333
  %v2335 = vpop.f32.mrf.mxu0
  %v2336 = vadd.f32 %v2322, %v2335
  %2337 = vdwg.mxu0
  %2338 = vmatpush.bf16.msra.mxu0 %v2164
  %2339 = vmatpush.bf16.msra.mxu0 %v2160
  %2340 = vmatpush.bf16.msra.mxu0 %v2156
  %2341 = vmatpush.bf16.msra.mxu0 %v2152
  %2342 = vmatpush.bf16.msra.mxu0 %v2148
  %2343 = vmatpush.bf16.msra.mxu0 %v2144
  %2344 = vmatpush.bf16.msra.mxu0 %v2140
  %2345 = vmatpush.bf16.msra.mxu0 %v2136
  %2346 = vmatmul.bf16.gmra.mxu0 %v1518
  %v2347 = vpop.f32.mrf.mxu0
  %v2348 = vadd.f32 %v2334, %v2347
  %v2349 = vpop.f32.mrf.mxu0
  %v2350 = vadd.f32 %v2336, %v2349
  %2351 = vdwg.mxu0
  %2352 = vmatpush.bf16.msra.mxu0 %v2069
  %2353 = vmatpush.bf16.msra.mxu0 %v2065
  %2354 = vmatpush.bf16.msra.mxu0 %v2061
  %2355 = vmatpush.bf16.msra.mxu0 %v2057
  %2356 = vmatpush.bf16.msra.mxu0 %v2053
  %2357 = vmatpush.bf16.msra.mxu0 %v2049
  %2358 = vmatpush.bf16.msra.mxu0 %v2045
  %2359 = vmatpush.bf16.msra.mxu0 %v2041
  %2360 = vmatmul.bf16.gmra.mxu0 %v1515
  %v2361 = vpop.f32.mrf.mxu0
  %v2362 = vadd.f32 %v1649, %v2361
  %v2363 = vpop.f32.mrf.mxu0
  %v2364 = vadd.f32 %v1649, %v2363
  %2365 = vdwg.mxu0
  %2366 = vmatpush.bf16.msra.mxu0 %v2101
  %2367 = vmatpush.bf16.msra.mxu0 %v2097
  %2368 = vmatpush.bf16.msra.mxu0 %v2093
  %2369 = vmatpush.bf16.msra.mxu0 %v2089
  %2370 = vmatpush.bf16.msra.mxu0 %v2085
  %2371 = vmatpush.bf16.msra.mxu0 %v2081
  %2372 = vmatpush.bf16.msra.mxu0 %v2077
  %2373 = vmatpush.bf16.msra.mxu0 %v2073
  %2374 = vmatmul.bf16.gmra.mxu0 %v1516
  %v2375 = vpop.f32.mrf.mxu0
  %v2376 = vadd.f32 %v2362, %v2375
  %v2377 = vpop.f32.mrf.mxu0
  %v2378 = vadd.f32 %v2364, %v2377
  %2379 = vdwg.mxu0
  %2380 = vmatpush.bf16.msra.mxu0 %v2133
  %2381 = vmatpush.bf16.msra.mxu0 %v2129
  %2382 = vmatpush.bf16.msra.mxu0 %v2125
  %2383 = vmatpush.bf16.msra.mxu0 %v2121
  %2384 = vmatpush.bf16.msra.mxu0 %v2117
  %2385 = vmatpush.bf16.msra.mxu0 %v2113
  %2386 = vmatpush.bf16.msra.mxu0 %v2109
  %2387 = vmatpush.bf16.msra.mxu0 %v2105
  %2388 = vmatmul.bf16.gmra.mxu0 %v1517
  %v2389 = vpop.f32.mrf.mxu0
  %v2390 = vadd.f32 %v2376, %v2389
  %v2391 = vpop.f32.mrf.mxu0
  %v2392 = vadd.f32 %v2378, %v2391
  %2393 = vdwg.mxu0
  %2394 = vmatpush.bf16.msra.mxu0 %v2165
  %2395 = vmatpush.bf16.msra.mxu0 %v2161
  %2396 = vmatpush.bf16.msra.mxu0 %v2157
  %2397 = vmatpush.bf16.msra.mxu0 %v2153
  %2398 = vmatpush.bf16.msra.mxu0 %v2149
  %2399 = vmatpush.bf16.msra.mxu0 %v2145
  %2400 = vmatpush.bf16.msra.mxu0 %v2141
  %2401 = vmatpush.bf16.msra.mxu0 %v2137
  %2402 = vmatmul.bf16.gmra.mxu0 %v1518
  %v2403 = vpop.f32.mrf.mxu0
  %v2404 = vadd.f32 %v2390, %v2403
  %v2405 = vpop.f32.mrf.mxu0
  %v2406 = vadd.f32 %v2392, %v2405
  %2407 = vdwg.mxu0
  %2408 = vmatpush.bf16.msra.mxu0 %v2070
  %2409 = vmatpush.bf16.msra.mxu0 %v2066
  %2410 = vmatpush.bf16.msra.mxu0 %v2062
  %2411 = vmatpush.bf16.msra.mxu0 %v2058
  %2412 = vmatpush.bf16.msra.mxu0 %v2054
  %2413 = vmatpush.bf16.msra.mxu0 %v2050
  %2414 = vmatpush.bf16.msra.mxu0 %v2046
  %2415 = vmatpush.bf16.msra.mxu0 %v2042
  %2416 = vmatmul.bf16.gmra.mxu0 %v1515
  %v2417 = vpop.f32.mrf.mxu0
  %v2418 = vadd.f32 %v1650, %v2417
  %v2419 = vpop.f32.mrf.mxu0
  %v2420 = vadd.f32 %v1650, %v2419
  %2421 = vdwg.mxu0
  %2422 = vmatpush.bf16.msra.mxu0 %v2102
  %2423 = vmatpush.bf16.msra.mxu0 %v2098
  %2424 = vmatpush.bf16.msra.mxu0 %v2094
  %2425 = vmatpush.bf16.msra.mxu0 %v2090
  %2426 = vmatpush.bf16.msra.mxu0 %v2086
  %2427 = vmatpush.bf16.msra.mxu0 %v2082
  %2428 = vmatpush.bf16.msra.mxu0 %v2078
  %2429 = vmatpush.bf16.msra.mxu0 %v2074
  %2430 = vmatmul.bf16.gmra.mxu0 %v1516
  %v2431 = vpop.f32.mrf.mxu0
  %v2432 = vadd.f32 %v2418, %v2431
  %v2433 = vpop.f32.mrf.mxu0
  %v2434 = vadd.f32 %v2420, %v2433
  %2435 = vdwg.mxu0
  %2436 = vmatpush.bf16.msra.mxu0 %v2134
  %2437 = vmatpush.bf16.msra.mxu0 %v2130
  %2438 = vmatpush.bf16.msra.mxu0 %v2126
  %2439 = vmatpush.bf16.msra.mxu0 %v2122
  %2440 = vmatpush.bf16.msra.mxu0 %v2118
  %2441 = vmatpush.bf16.msra.mxu0 %v2114
  %2442 = vmatpush.bf16.msra.mxu0 %v2110
  %2443 = vmatpush.bf16.msra.mxu0 %v2106
  %2444 = vmatmul.bf16.gmra.mxu0 %v1517
  %v2445 = vpop.f32.mrf.mxu0
  %v2446 = vadd.f32 %v2432, %v2445
  %v2447 = vpop.f32.mrf.mxu0
  %v2448 = vadd.f32 %v2434, %v2447
  %2449 = vdwg.mxu0
  %2450 = vmatpush.bf16.msra.mxu0 %v2166
  %2451 = vmatpush.bf16.msra.mxu0 %v2162
  %2452 = vmatpush.bf16.msra.mxu0 %v2158
  %2453 = vmatpush.bf16.msra.mxu0 %v2154
  %2454 = vmatpush.bf16.msra.mxu0 %v2150
  %2455 = vmatpush.bf16.msra.mxu0 %v2146
  %2456 = vmatpush.bf16.msra.mxu0 %v2142
  %2457 = vmatpush.bf16.msra.mxu0 %v2138
  %2458 = vmatmul.bf16.gmra.mxu0 %v1518
  %v2459 = vpop.f32.mrf.mxu0
  %v2460 = vadd.f32 %v2446, %v2459
  %v2461 = vpop.f32.mrf.mxu0
  %v2462 = vadd.f32 %v2448, %v2461
  %2463 = vdwg.mxu0
  %2464 = vmatpush.bf16.msra.mxu0 %v2071
  %2465 = vmatpush.bf16.msra.mxu0 %v2067
  %2466 = vmatpush.bf16.msra.mxu0 %v2063
  %2467 = vmatpush.bf16.msra.mxu0 %v2059
  %2468 = vmatpush.bf16.msra.mxu0 %v2055
  %2469 = vmatpush.bf16.msra.mxu0 %v2051
  %2470 = vmatpush.bf16.msra.mxu0 %v2047
  %2471 = vmatpush.bf16.msra.mxu0 %v2043
  %2472 = vmatmul.bf16.gmra.mxu0 %v1515
  %v2473 = vpop.f32.mrf.mxu0
  %v2474 = vadd.f32 %v1651, %v2473
  %v2475 = vpop.f32.mrf.mxu0
  %v2476 = vadd.f32 %v1651, %v2475
  %2477 = vdwg.mxu0
  %2478 = vmatpush.bf16.msra.mxu0 %v2103
  %2479 = vmatpush.bf16.msra.mxu0 %v2099
  %2480 = vmatpush.bf16.msra.mxu0 %v2095
  %2481 = vmatpush.bf16.msra.mxu0 %v2091
  %2482 = vmatpush.bf16.msra.mxu0 %v2087
  %2483 = vmatpush.bf16.msra.mxu0 %v2083
  %2484 = vmatpush.bf16.msra.mxu0 %v2079
  %2485 = vmatpush.bf16.msra.mxu0 %v2075
  %2486 = vmatmul.bf16.gmra.mxu0 %v1516
  %v2487 = vpop.f32.mrf.mxu0
  %v2488 = vadd.f32 %v2474, %v2487
  %v2489 = vpop.f32.mrf.mxu0
  %v2490 = vadd.f32 %v2476, %v2489
  %2491 = vdwg.mxu0
  %2492 = vmatpush.bf16.msra.mxu0 %v2135
  %2493 = vmatpush.bf16.msra.mxu0 %v2131
  %2494 = vmatpush.bf16.msra.mxu0 %v2127
  %2495 = vmatpush.bf16.msra.mxu0 %v2123
  %2496 = vmatpush.bf16.msra.mxu0 %v2119
  %2497 = vmatpush.bf16.msra.mxu0 %v2115
  %2498 = vmatpush.bf16.msra.mxu0 %v2111
  %2499 = vmatpush.bf16.msra.mxu0 %v2107
  %2500 = vmatmul.bf16.gmra.mxu0 %v1517
  %v2501 = vpop.f32.mrf.mxu0
  %v2502 = vadd.f32 %v2488, %v2501
  %v2503 = vpop.f32.mrf.mxu0
  %v2504 = vadd.f32 %v2490, %v2503
  %2505 = vdwg.mxu0
  %2506 = vmatpush.bf16.msra.mxu0 %v2167
  %2507 = vmatpush.bf16.msra.mxu0 %v2163
  %2508 = vmatpush.bf16.msra.mxu0 %v2159
  %2509 = vmatpush.bf16.msra.mxu0 %v2155
  %2510 = vmatpush.bf16.msra.mxu0 %v2151
  %2511 = vmatpush.bf16.msra.mxu0 %v2147
  %2512 = vmatpush.bf16.msra.mxu0 %v2143
  %2513 = vmatpush.bf16.msra.mxu0 %v2139
  %2514 = vmatmul.bf16.gmra.mxu0 %v1518
  %v2515 = vpop.f32.mrf.mxu0
  %v2516 = vadd.f32 %v2502, %v2515
  %v2517 = vpop.f32.mrf.mxu0
  %v2518 = vadd.f32 %v2504, %v2517
  %2519 = vdwg.mxu0
  %vm2520 = vcmp.gt.f32.partialorder %v2348, 0.0
  %vm2521 = vcmp.gt.f32.partialorder %v2404, 0.0
  %vm2522 = vcmp.gt.f32.partialorder %v2460, 0.0
  %vm2523 = vcmp.gt.f32.partialorder %v2516, 0.0
  %vm2524 = vcmp.gt.f32.partialorder %v2350, 0.0
  %vm2525 = vcmp.gt.f32.partialorder %v2406, 0.0
  %vm2526 = vcmp.gt.f32.partialorder %v2462, 0.0
  %vm2527 = vcmp.gt.f32.partialorder %v2518, 0.0
  %v2528 = vmul.f32 %v2348, 0.2
  %v2529 = vmul.f32 %v2404, 0.2
  %v2530 = vmul.f32 %v2460, 0.2
  %v2531 = vmul.f32 %v2516, 0.2
  %v2532 = vmul.f32 %v2350, 0.2
  %v2533 = vmul.f32 %v2406, 0.2
  %v2534 = vmul.f32 %v2462, 0.2
  %v2535 = vmul.f32 %v2518, 0.2
  %v2536 = vsel %vm2520, %v2348, %v2528
  %v2537 = vsel %vm2521, %v2404, %v2529
  %v2538 = vsel %vm2522, %v2460, %v2530
  %v2539 = vsel %vm2523, %v2516, %v2531
  %v2540 = vsel %vm2524, %v2350, %v2532
  %v2541 = vsel %vm2525, %v2406, %v2533
  %v2542 = vsel %vm2526, %v2462, %v2534
  %v2543 = vsel %vm2527, %v2518, %v2535
  %v2545 = vperm.slane %v33, 0
  %v2546 = vperm.slane %v33, 1
  %v2547 = vperm.slane %v33, 2
  %v2548 = vperm.slane %v33, 3
  %v2553 = vmul.f32 %v2536, %v2545
  %v2554 = vmul.f32 %v2537, %v2546
  %v2555 = vmul.f32 %v2538, %v2547
  %v2556 = vmul.f32 %v2539, %v2548
  %v2557 = vmul.f32 %v2540, %v2545
  %v2558 = vmul.f32 %v2541, %v2546
  %v2559 = vmul.f32 %v2542, %v2547
  %v2560 = vmul.f32 %v2543, %v2548
  %v2561 = vadd.f32 %v2553, %v2554
  %v2562 = vadd.f32 %v2561, %v2555
  %v2563 = vadd.f32 %v2562, %v2556
  %2564 = vadd.xlane.f32.xlu0 %v2563
  %v2565 = vpop.xlane.xlu0 %2564
  %v2566 = vadd.f32 %v2557, %v2558
  %v2567 = vadd.f32 %v2566, %v2559
  %v2568 = vadd.f32 %v2567, %v2560
  %2569 = vadd.xlane.f32.xlu0 %v2568
  %v2570 = vpop.xlane.xlu0 %2569
  %v2571 = vadd.f32 %v2565, %v34
  %v2572 = vadd.f32 %v2570, %v34
  %v2573 = vxor.u32 %v2571, 2147483648
  %v2574 = vxor.u32 %v2572, 2147483648
  %v2575 = vmul.f32 %v2573, 1.442695
  %v2576 = vpow.pop %v2575
  %v2577 = vmul.f32 %v2574, 1.442695
  %v2578 = vpow.pop %v2577
  %v2579 = vadd.f32 %v2576, 1.0
  %v2580 = vadd.f32 %v2578, 1.0
  %v2581 = vrcp.pop %v2579
  %v2582 = vmul.f32 %v2579, %v2581
  %v2583 = vsub.f32 1.0, %v2582
  %v2584 = vmul.f32 %v2581, %v2583
  %v2585 = vadd.f32 %v2581, %v2584
  %vm2586 = vweird.f32 %v2579
  %vm2587 = vweird.f32 %v2581
  %vm2588 = vmor %vm2586, %vm2587
  %v2589 = vsel %vm2588, %v2581, %v2585
  %v2590 = vand.u32 2147483647, %v2579
  %vm2591 = vcmp.eq.f32.partialorder %v2590, 8.507059e+37
  %v2592 = vand.u32 %v2579, 2147483648
  %v2593 = vor.u32 1.1754944e-38, %v2592
  %v2594 = vsel %vm2591, %v2593, %v2589
  %v2595 = vmul.f32 1.0, %v2594
  %v2596 = vrcp.pop %v2580
  %v2597 = vmul.f32 %v2580, %v2596
  %v2598 = vsub.f32 1.0, %v2597
  %v2599 = vmul.f32 %v2596, %v2598
  %v2600 = vadd.f32 %v2596, %v2599
  %vm2601 = vweird.f32 %v2580
  %vm2602 = vweird.f32 %v2596
  %vm2603 = vmor %vm2601, %vm2602
  %v2604 = vsel %vm2603, %v2596, %v2600
  %v2605 = vand.u32 2147483647, %v2580
  %vm2606 = vcmp.eq.f32.partialorder %v2605, 8.507059e+37
  %v2607 = vand.u32 %v2580, 2147483648
  %v2608 = vor.u32 1.1754944e-38, %v2607
  %v2609 = vsel %vm2606, %v2608, %v2604
  %v2610 = vmul.f32 1.0, %v2609
  %vm2611 = vcmask 7168
  %2612 = vst.msk [vmem:[%s7] sm:$0xff] %vm2611, %v2595
  %2613 = vst.msk [vmem:[%s7 + $0x8] sm:$0xff] %vm2611, %v2610
  // Predicated region
  $region30: #{discriminator_cgan_forward.1} parent=0 // pred_check
    _
  $region31: #{discriminator_cgan_forward.1} parent=0 // pred_check_branch
    %2615 = sbr.rel (0) target = $region33
  $region32: #{discriminator_cgan_forward.1} parent=0 // pred_region
    _
  $region33: #{discriminator_cgan_forward.1} parent=0 // pred_fallthru
    _
  // Predicated region
  $region34: #{discriminator_cgan_forward.1} parent=0 // pred_check
    _
  $region35: #{discriminator_cgan_forward.1} parent=0 // pred_check_branch
    %2617 = sbr.rel (0) target = $region37
  $region36: #{discriminator_cgan_forward.1} parent=0 // pred_region
    _
  $region37: #{discriminator_cgan_forward.1} parent=0 // pred_fallthru
    _

</llo_original>
